<compile_context>
chip_gen: v6e
topology: v6e:2x2x1
jax: 0.10.0
libtpu: 0.0.40
codegen_flags: <defaults>
</compile_context>

<pallas_src>
import functools
import numpy as np

import jax
import jax.numpy as jnp
from jax.experimental import pallas as pl
from jax.experimental.pallas import tpu as pltpu

EPS = 1e-5
DEFAULT_THRESHOLD = 0.005
VMEM_LIMIT = 64 * 1024 * 1024   # fits the v7x 64 MiB budget at these block sizes


# ----------------------------------------------------------------------------
# Shared conv kernel: [optional fused BN+ReLU of previous conv] -> stride-1
# KxK conv as Kc accumulated per-tap MXU dots over an Nb-image block,
# plus per-block BN partial statistics.
# ----------------------------------------------------------------------------
def _conv_rows_kernel(*refs, Kc, Nb, Hc, pad_lo, pad_hi, L1, n_out, with_affine):
    if with_affine:
        x_ref, s_ref, b_ref, t_ref = refs[:4]
        rest = refs[4:]
    else:
        x_ref, t_ref = refs[:2]
        s_ref = b_ref = None
        rest = refs[2:]
    y_refs = rest[:n_out]
    st_ref = rest[n_out]
    pad_ref = rest[n_out + 1]
    L_use = x_ref.shape[-1]

    a = x_ref[...]                                    # (Nb, Hc, L_use)
    if with_affine:                                   # fused bn + relu epilogue of previous conv (f32)
        a = jnp.maximum(a * s_ref[...] + b_ref[...], 0.0)

    # in-kernel zero padding of the H border (W border is folded into T).
    # Only the border rows are zeroed; the interior is fully overwritten.
    # (kept per-step, not per-grid, so splitting the parallel axis across
    #  TensorCores stays correct.)
    if pad_lo:
        pad_ref[:, 0:pad_lo, :] = jnp.zeros((Nb, pad_lo, L_use), jnp.float32)
    if pad_hi:
        pad_ref[:, pad_lo + Hc:pad_lo + Hc + pad_hi, :] = jnp.zeros(
            (Nb, pad_hi, L_use), jnp.float32)
    pad_ref[:, pad_lo:pad_lo + Hc, :] = a.astype(jnp.float32)

    # per-tap accumulated bf16 MXU dots, f32 accumulate; M = Nb*Hc rows.
    M = Nb * Hc
    acc = None
    for A in range(Kc):                               # static unroll, Kc in {2, 3}
        lhs = pad_ref[:, A:A + Hc, :].astype(jnp.bfloat16).reshape(M, L_use)
        d = jnp.dot(lhs, t_ref[A], preferred_element_type=jnp.float32)
        acc = d if acc is None else acc + d

    # per-block BN partial statistics [sum; sumsq] over the M rows
    st_ref[0] = jnp.concatenate(
        [jnp.sum(acc, axis=0, keepdims=True),
         jnp.sum(acc * acc, axis=0, keepdims=True)], axis=0)

    y3 = acc.reshape(Nb, Hc, n_out * L1)
    if n_out == 1:
        y_refs[0][...] = y3
    else:                                             # split fused conv1 | downsample lanes
        for j in range(n_out):
            y_refs[j][...] = y3[:, :, j * L1:(j + 1) * L1]


def _conv_rows(x_rows, t_taps, *, Kc, pad_lo, pad_hi, n_out, Nb,
               scale_row=None, shift_row=None):
    N, Hc, L_use = x_rows.shape
    Lout = t_taps.shape[-1]
    L1 = Lout // n_out
    G = N // Nb
    with_affine = scale_row is not None

    inputs = [x_rows]
    in_specs = [pl.BlockSpec((Nb, Hc, L_use), lambda g: (g, 0, 0))]
    if with_affine:
        inputs += [scale_row, shift_row]
        in_specs += [pl.BlockSpec((1, L_use), lambda g: (0, 0)),
                     pl.BlockSpec((1, L_use), lambda g: (0, 0))]
    inputs.append(t_taps)
    in_specs.append(pl.BlockSpec(t_taps.shape, lambda g: (0, 0, 0)))

    out_shape = tuple(jax.ShapeDtypeStruct((N, Hc, L1), jnp.float32)
                      for _ in range(n_out)) \
        + (jax.ShapeDtypeStruct((G, 2, Lout), jnp.float32),)
    out_specs = tuple(pl.BlockSpec((Nb, Hc, L1), lambda g: (g, 0, 0))
                      for _ in range(n_out)) \
        + (pl.BlockSpec((1, 2, Lout), lambda g: (g, 0, 0)),)

    kern = functools.partial(_conv_rows_kernel, Kc=Kc, Nb=Nb, Hc=Hc,
                             pad_lo=pad_lo, pad_hi=pad_hi, L1=L1,
                             n_out=n_out, with_affine=with_affine)
    outs = pl.pallas_call(
        kern,
        out_shape=out_shape,
        grid=(G,),
        in_specs=in_specs,
        out_specs=out_specs,
        scratch_shapes=[pltpu.VMEM((Nb, Hc + pad_lo + pad_hi, L_use), jnp.float32)],
        compiler_params=pltpu.CompilerParams(
            dimension_semantics=("parallel",),
            vmem_limit_bytes=VMEM_LIMIT),
    )(*inputs)
    return outs[:-1], outs[-1]


# ----------------------------------------------------------------------------
# Final epilogue kernel: bn2 + (bn_ds(downsample) | identity) + add + relu.
# All operands are presented as lane-dense (>=128 lane) packed row views.
# ----------------------------------------------------------------------------
def _epilogue_kernel(y2_ref, id_ref, s2_ref, b2_ref, sd_ref, bd_ref, o_ref):
    o_ref[...] = jnp.maximum(
        y2_ref[...] * s2_ref[...] + b2_ref[...]
        + id_ref[...] * sd_ref[...] + bd_ref[...], 0.0)


def _epilogue(y2v, idv, s2_row, b2_row, sd_row, bd_row, *, Nb):
    N, Hp, Lp = y2v.shape
    G = N // Nb
    img = pl.BlockSpec((Nb, Hp, Lp), lambda g: (g, 0, 0))
    vec = pl.BlockSpec((1, Lp), lambda g: (0, 0))
    return pl.pallas_call(
        _epilogue_kernel,
        out_shape=jax.ShapeDtypeStruct((N, Hp, Lp), jnp.float32),
        grid=(G,),
        in_specs=[img, img, vec, vec, vec, vec],
        out_specs=img,
        compiler_params=pltpu.CompilerParams(
            dimension_semantics=("parallel",),
            vmem_limit_bytes=VMEM_LIMIT),
    )(y2v, idv, s2_row, b2_row, sd_row, bd_row)


# ----------------------------------------------------------------------------
# Glue: banded (Toeplitz) per-tap weight construction, BN finalization, init.
# ----------------------------------------------------------------------------
def _band_indicator(Kc, Wc, pad_w_lo):
    B = np.arange(Kc)[:, None, None]
    b = np.arange(Wc)[None, :, None]
    ow = np.arange(Wc)[None, None, :]
    return jnp.asarray((b == ow + B - pad_w_lo).astype(np.float32))   # (Kc, Wc, Wc)


def _toeplitz_conv_taps(w_cell, Wc, pad_w_lo):
    # w_cell: (Kc, Kc, Cs, Cout) HWIO -> per vertical tap (Kc, Wc*Cs, Wc*Cout)
    Kc, _, Cs, Cout = w_cell.shape
    ind = _band_indicator(Kc, Wc, pad_w_lo)
    T = jnp.einsum('ABcd,Bbw->Abcwd', w_cell, ind)
    return T.reshape(Kc, Wc * Cs, Wc * Cout)


def _pointwise_tap(w_cell, Wc):
    # 1x1 conv weights, block-diagonal over w: (Cs, Cout) -> (Wc*Cs, Wc*Cout)
    Cs, Cout = w_cell.shape
    eye = jnp.eye(Wc, dtype=jnp.float32)
    T = jnp.einsum('cd,bw->bcwd', w_cell, eye)
    return T.reshape(Wc * Cs, Wc * Cout)


def _bn_scale_shift(stats_sum, gamma, beta, cnt):
    # stats_sum: (2, Wc*Cout) batch-summed [sum; sumsq], lanes ordered (w, c).
    # TODO(synk): E[y^2]-E[y]^2 can cancel at very large N*H*W; fine at these sizes.
    Cout = gamma.shape[0]
    s = stats_sum.reshape(2, -1, Cout).sum(axis=1)
    mean = s[0] / cnt
    var = s[1] / cnt - mean * mean            # biased, training-mode variance
    scale = gamma * jax.lax.rsqrt(var + EPS)
    shift = beta - mean * scale
    return scale, shift


def _pick_nb(N, Hc, target_rows=256):
    # batch images into the matmul M dimension (target ~256 rows; >=128 fills
    # the MXU on v5e, 256 on v6e/v7x).  For v7x one may cap Nb so that at
    # least 2 parallel grid steps remain for the second TensorCore.
    nb = max(1, min(N, target_rows // max(Hc, 1)))
    while N % nb:
        nb -= 1
    return nb


def init_masked_conv(key, in_c, out_c, K):
    k1, k2, k3 = jax.random.split(key, 3)
    fan_out = out_c * K * K                   # kaiming_normal_, mode='fan_out', relu
    std = float(np.sqrt(2.0 / fan_out))
    w = std * jax.random.normal(k1, (K, K, in_c, out_c), jnp.float32)   # HWIO, pre-transposed once
    mask_real = (jax.random.uniform(k2, (K, K, in_c, out_c),
                                    minval=-0.01, maxval=0.01) + DEFAULT_THRESHOLD)
    threshold = jax.random.uniform(k3, (1,), minval=-DEFAULT_THRESHOLD,
                                   maxval=DEFAULT_THRESHOLD)
    return dict(w=w, mask_real=mask_real, threshold=threshold)


def init_block(key, in_c, out_c, stride):
    keys = jax.random.split(key, 3)
    params = dict(
        conv1=init_masked_conv(keys[0], in_c, out_c, 3),
        conv2=init_masked_conv(keys[1], out_c, out_c, 3),
        bn1=dict(gamma=jnp.ones((out_c,), jnp.float32),
                 beta=jnp.zeros((out_c,), jnp.float32)),
        bn2=dict(gamma=jnp.ones((out_c,), jnp.float32),
                 beta=jnp.zeros((out_c,), jnp.float32)),
    )
    if stride != 1 or in_c != out_c:
        params["ds_conv"] = init_masked_conv(keys[2], in_c, out_c, 1)
        params["ds_bn"] = dict(gamma=jnp.ones((out_c,), jnp.float32),
                               beta=jnp.zeros((out_c,), jnp.float32))
    return params


def masked_weight(p):
    mask = (p["mask_real"] > p["threshold"][0]).astype(jnp.float32)   # Binarizer
    return p["w"] * mask


# ----------------------------------------------------------------------------
# Forward pass.
# ----------------------------------------------------------------------------
def block_forward_nhwc(params, x, stride):
    N, H, W, Cin = x.shape
    Cout = params["conv1"]["w"].shape[-1]
    has_ds = "ds_conv" in params
    x = x.astype(jnp.float32)

    w1 = masked_weight(params["conv1"])               # (3, 3, Cin, Cout)
    w2 = masked_weight(params["conv2"])               # (3, 3, Cout, Cout)

    # --- fold the stride into the layout (space-to-depth) so every conv in the
    #     kernels is stride-1 (direct strided compute, no subsample waste) ---
    if stride == 1:
        Hc, Wc, Cs = H, W, Cin
        xs32 = x.reshape(N, Hc, Wc * Cs)
        w1c = w1
        Kc, pad_lo, pad_hi = 3, 1, 1
    elif stride == 2:
        assert H % 2 == 0 and W % 2 == 0
        Hc, Wc, Cs = H // 2, W // 2, 4 * Cin
        xs32 = (x.reshape(N, Hc, 2, Wc, 2, Cin)
                 .transpose(0, 1, 3, 2, 4, 5)
                 .reshape(N, Hc, Wc * Cs))
        # stride-2 3x3/pad-1 conv == stride-1 2x2 conv in cell space
        w1c = jnp.zeros((2, 2, 2, 2, Cin, Cout), jnp.float32)
        for kh in range(3):
            for kw in range(3):
                w1c = w1c.at[(kh + 1) // 2, (kw + 1) // 2,
                             (kh + 1) % 2, (kw + 1) % 2].set(w1[kh, kw])
        w1c = w1c.reshape(2, 2, Cs, Cout)
        Kc, pad_lo, pad_hi = 2, 1, 0
    else:
        raise NotImplementedError("stride must be 1 or 2")
    xs = xs32.astype(jnp.bfloat16)   # halves stage-1 DMA; bit-identical to in-kernel cast

    L1 = Wc * Cout
    cnt = float(N * Hc * Wc)
    Nb = _pick_nb(N, Hc)

    # per-tap banded weights; the 1x1 downsample conv is fused into the same dots
    T1_taps = _toeplitz_conv_taps(w1c, Wc, pad_w_lo=1)        # (Kc, Wc*Cs, L1)
    if has_ds:
        wd = masked_weight(params["ds_conv"])[0, 0]           # (Cin, Cout)
        wd_cell = wd if stride == 1 else \
            jnp.zeros((Cs, Cout), jnp.float32).at[:Cin, :].set(wd)
        Td = _pointwise_tap(wd_cell, Wc)                      # (Wc*Cs, L1)
        Td_taps = jnp.zeros((Kc, Wc * Cs, L1), jnp.float32).at[pad_lo].set(Td)
        T_stage1 = jnp.concatenate([T1_taps, Td_taps], axis=2)
        n_out1 = 2
    else:
        T_stage1 = T1_taps
        n_out1 = 1
    T_stage1 = T_stage1.astype(jnp.bfloat16)

    # --- stage 1: conv1 (+ fused downsample conv) + BN partial stats ---
    ys1, st1 = _conv_rows(xs, T_stage1, Kc=Kc, pad_lo=pad_lo, pad_hi=pad_hi,
                          n_out=n_out1, Nb=Nb)
    st1 = st1.sum(axis=0)                                     # (2, n_out1*L1), tiny reduction
    y1 = ys1[0]

    sc1, sh1 = _bn_scale_shift(st1[:, :L1], params["bn1"]["gamma"],
                               params["bn1"]["beta"], cnt)
    s1_row = jnp.tile(sc1, Wc)[None, :]
    b1_row = jnp.tile(sh1, Wc)[None, :]

    # --- stage 2: fused bn1+relu -> conv2 (3x3, stride 1) + BN partial stats ---
    T2_taps = _toeplitz_conv_taps(w2, Wc, pad_w_lo=1).astype(jnp.bfloat16)
    ys2, st2 = _conv_rows(y1, T2_taps, Kc=3, pad_lo=1, pad_hi=1,
                          n_out=1, Nb=Nb, scale_row=s1_row, shift_row=b1_row)
    y2 = ys2[0]
    sc2, sh2 = _bn_scale_shift(st2.sum(axis=0), params["bn2"]["gamma"],
                               params["bn2"]["beta"], cnt)

    if has_ds:
        scd, shd = _bn_scale_shift(st1[:, L1:], params["ds_bn"]["gamma"],
                                   params["ds_bn"]["beta"], cnt)
        id_src = ys1[1]                                       # (N, Hc, L1) f32
    else:
        scd = jnp.ones((Cout,), jnp.float32)
        shd = jnp.zeros((Cout,), jnp.float32)
        id_src = xs32                                         # identity = x (f32)

    # --- stage 3: bn2 + (bn_ds(downsample) | identity) + add + relu,
    #     on lane-dense packed row views (contiguous reshapes, metadata only) ---
    pf = 2 if (L1 < 128 and Hc % 2 == 0) else 1
    Hp, Lp = Hc // pf, pf * L1
    y2v = y2.reshape(N, Hp, Lp)
    idv = id_src.reshape(N, Hp, Lp)
    s2_row = jnp.tile(sc2, Wc * pf)[None, :]
    b2_row = jnp.tile(sh2, Wc * pf)[None, :]
    sd_row = jnp.tile(scd, Wc * pf)[None, :]
    bd_row = jnp.tile(shd, Wc * pf)[None, :]

    out = _epilogue(y2v, idv, s2_row, b2_row, sd_row, bd_row, Nb=Nb)
    return out.reshape(N, Hc, Wc, Cout)


def block_forward(params, x_nchw, stride):
    # PyTorch-style NCHW boundary; everything inside is NHWC row slabs.
    x = jnp.transpose(x_nchw, (0, 2, 3, 1))
    out = block_forward_nhwc(params, x, stride)
    return jnp.transpose(out, (0, 3, 1, 2))


# ----------------------------------------------------------------------------
# Pure-JAX reference (correctness check).  Conv inputs are cast to bf16 to
# match the kernels' MXU input precision (f32 accumulation in both).
# ----------------------------------------------------------------------------
def ref_forward(params, x_nchw, stride):
    x = jnp.transpose(x_nchw, (0, 2, 3, 1)).astype(jnp.float32)

    def conv(y, w_hwio, s, p):
        return jax.lax.conv_general_dilated(
            y.astype(jnp.bfloat16), w_hwio.astype(jnp.bfloat16),
            window_strides=(s, s), padding=[(p, p), (p, p)],
            dimension_numbers=("NHWC", "HWIO", "NHWC"),
            preferred_element_type=jnp.float32)

    def bn(y, g, b):
        m = jnp.mean(y, axis=(0, 1, 2), keepdims=True)
        v = jnp.mean((y - m) ** 2, axis=(0, 1, 2), keepdims=True)   # biased
        return (y - m) * jax.lax.rsqrt(v + EPS) * g.reshape(1, 1, 1, -1) \
               + b.reshape(1, 1, 1, -1)

    w1 = masked_weight(params["conv1"])
    w2 = masked_weight(params["conv2"])
    out = jnp.maximum(bn(conv(x, w1, stride, 1),
                         params["bn1"]["gamma"], params["bn1"]["beta"]), 0.0)
    out = bn(conv(out, w2, 1, 1), params["bn2"]["gamma"], params["bn2"]["beta"])
    if "ds_conv" in params:
        wd = masked_weight(params["ds_conv"])
        identity = bn(conv(x, wd, stride, 0),
                      params["ds_bn"]["gamma"], params["ds_bn"]["beta"])
    else:
        identity = x
    out = jnp.maximum(out + identity, 0.0)
    return jnp.transpose(out, (0, 3, 1, 2))


if __name__ == "__main__":
    key = jax.random.PRNGKey(0)
    kp, kx, kp2, kx2 = jax.random.split(key, 4)

    # --- case 1: stride-2 + downsample path (conv1 + 1x1 ds fused) ---
    N, Cin, Cout, H, W, stride = 2, 4, 8, 16, 16, 2
    params = init_block(kp, Cin, Cout, stride)
    x = jax.random.normal(kx, (N, Cin, H, W), jnp.float32)       # PyTorch-style NCHW
    fwd = jax.jit(functools.partial(block_forward, stride=stride))
    out = jax.block_until_ready(fwd(params, x))
    assert out.shape == (N, Cout, H // stride, W // stride), out.shape
    ref = ref_forward(params, x, stride)
    np.testing.assert_allclose(np.asarray(out), np.asarray(ref),
                               rtol=5e-3, atol=5e-3)

    # --- case 2: stride-1 identity path (no downsample) ---
    N2, C2, H2, W2 = 2, 8, 16, 16
    params2 = init_block(kp2, C2, C2, 1)
    x2 = jax.random.normal(kx2, (N2, C2, H2, W2), jnp.float32)
    fwd2 = jax.jit(functools.partial(block_forward, stride=1))
    out2 = jax.block_until_ready(fwd2(params2, x2))
    assert out2.shape == (N2, C2, H2, W2), out2.shape
    ref2 = ref_forward(params2, x2, 1)
    np.testing.assert_allclose(np.asarray(out2), np.asarray(ref2),
                               rtol=5e-3, atol=5e-3)

    print("KERNEL_OK")
</pallas_src>

<mosaic_0001>
module attributes {stable_mosaic.version = 11 : i64} {
  func.func @_conv_rows_kernel(%arg0: i32, %arg1: memref<2x8x128xbf16, #tpu.memory_space<vmem>>, %arg2: memref<2x128x128xbf16, #tpu.memory_space<vmem>>, %arg3: memref<2x8x64xf32, #tpu.memory_space<vmem>>, %arg4: memref<2x8x64xf32, #tpu.memory_space<vmem>>, %arg5: memref<1x2x128xf32, #tpu.memory_space<vmem>>, %arg6: memref<2x9x128xf32, #tpu.memory_space<vmem>>) attributes {dimension_semantics = [#tpu.dimension_semantics<parallel>], iteration_bounds = array<i64: 1>, scalar_prefetch = 0 : i64, scratch_operands = 1 : i64, tpu.core_type = #tpu.core_type<tc>, window_params = [{transform_indices = @transform_0, window_bounds = array<i64: 2, 8, 128>}, {pipeline_mode = #tpu.pipeline_mode<synchronous>, transform_indices = @transform_1, window_bounds = array<i64: 2, 128, 128>}, {transform_indices = @transform_2, window_bounds = array<i64: 2, 8, 64>}, {transform_indices = @transform_3, window_bounds = array<i64: 2, 8, 64>}, {transform_indices = @transform_4, window_bounds = array<i64: 1, 2, 128>}]} {
    %c0 = arith.constant 0 : index
    %c0_0 = arith.constant 0 : index
    %c0_1 = arith.constant 0 : index
    %0 = vector.load %arg1[%c0, %c0_0, %c0_1] : memref<2x8x128xbf16, #tpu.memory_space<vmem>>, vector<2x8x128xbf16>
    %cst = arith.constant 0.000000e+00 : f32
    %1 = vector.broadcast %cst : f32 to vector<2x1x128xf32>
    %c0_2 = arith.constant 0 : index
    %c0_3 = arith.constant 0 : index
    %c0_4 = arith.constant 0 : index
    %2 = vector.load %arg6[%c0_2, %c0_3, %c0_4] : memref<2x9x128xf32, #tpu.memory_space<vmem>>, vector<2x1x128xf32>
    tpu.vector_store %arg6[%c0_2, %c0_3, %c0_4], %1 {strides = array<i32>} : memref<2x9x128xf32, #tpu.memory_space<vmem>>, vector<2x1x128xf32>,
    %3 = arith.extf %0 : vector<2x8x128xbf16> to vector<2x8x128xf32>
    %c0_5 = arith.constant 0 : index
    %c1 = arith.constant 1 : index
    %c0_6 = arith.constant 0 : index
    %4 = vector.load %arg6[%c0_5, %c1, %c0_6] : memref<2x9x128xf32, #tpu.memory_space<vmem>>, vector<2x8x128xf32>
    tpu.vector_store %arg6[%c0_5, %c1, %c0_6], %3 {strides = array<i32>} : memref<2x9x128xf32, #tpu.memory_space<vmem>>, vector<2x8x128xf32>,
    %c0_7 = arith.constant 0 : index
    %c0_8 = arith.constant 0 : index
    %c0_9 = arith.constant 0 : index
    %5 = vector.load %arg6[%c0_7, %c0_8, %c0_9] : memref<2x9x128xf32, #tpu.memory_space<vmem>>, vector<2x8x128xf32>
    %6 = arith.truncf %5 : vector<2x8x128xf32> to vector<2x8x128xbf16>
    %7 = vector.shape_cast %6 : vector<2x8x128xbf16> to vector<16x128xbf16>
    %c0_10 = arith.constant 0 : index
    %c0_11 = arith.constant 0 : index
    %c0_12 = arith.constant 0 : index
    %8 = vector.load %arg2[%c0_10, %c0_11, %c0_12] : memref<2x128x128xbf16, #tpu.memory_space<vmem>>, vector<1x128x128xbf16>
    %9 = vector.shape_cast %8 : vector<1x128x128xbf16> to vector<128x128xbf16>
    %cst_13 = arith.constant dense<0.000000e+00> : vector<16x128xf32>
    %10 = tpu.matmul %7, %9, %cst_13 {dimension_numbers = #tpu.dot_dimension_numbers<[1], [0], [0], [1], [0, 0, 1, 1], [], []>} : vector<16x128xbf16>, vector<128x128xbf16>, vector<16x128xf32> -> vector<16x128xf32>
    %c0_14 = arith.constant 0 : index
    %c1_15 = arith.constant 1 : index
    %c0_16 = arith.constant 0 : index
    %11 = vector.load %arg6[%c0_14, %c1_15, %c0_16] : memref<2x9x128xf32, #tpu.memory_space<vmem>>, vector<2x8x128xf32>
    %12 = arith.truncf %11 : vector<2x8x128xf32> to vector<2x8x128xbf16>
    %13 = vector.shape_cast %12 : vector<2x8x128xbf16> to vector<16x128xbf16>
    %c1_17 = arith.constant 1 : index
    %c0_18 = arith.constant 0 : index
    %c0_19 = arith.constant 0 : index
    %14 = vector.load %arg2[%c1_17, %c0_18, %c0_19] : memref<2x128x128xbf16, #tpu.memory_space<vmem>>, vector<1x128x128xbf16>
    %15 = vector.shape_cast %14 : vector<1x128x128xbf16> to vector<128x128xbf16>
    %cst_20 = arith.constant dense<0.000000e+00> : vector<16x128xf32>
    %16 = tpu.matmul %13, %15, %cst_20 {dimension_numbers = #tpu.dot_dimension_numbers<[1], [0], [0], [1], [0, 0, 1, 1], [], []>} : vector<16x128xbf16>, vector<128x128xbf16>, vector<16x128xf32> -> vector<16x128xf32>
    %17 = arith.addf %10, %16 : vector<16x128xf32>
    %cst_21 = arith.constant dense<0.000000e+00> : vector<128xf32>
    %18 = vector.multi_reduction <add>, %17, %cst_21 [0] : vector<16x128xf32> to vector<128xf32>
    %19 = vector.shape_cast %18 : vector<128xf32> to vector<1x128xf32>
    %20 = arith.mulf %17, %17 : vector<16x128xf32>
    %cst_22 = arith.constant dense<0.000000e+00> : vector<128xf32>
    %21 = vector.multi_reduction <add>, %20, %cst_22 [0] : vector<16x128xf32> to vector<128xf32>
    %22 = vector.shape_cast %21 : vector<128xf32> to vector<1x128xf32>
    %23 = tpu.concatenate %19, %22 in 0 : vector<1x128xf32>, vector<1x128xf32> -> vector<2x128xf32>
    %c0_23 = arith.constant 0 : index
    %c0_24 = arith.constant 0 : index
    %c0_25 = arith.constant 0 : index
    %24 = vector.load %arg5[%c0_23, %c0_24, %c0_25] : memref<1x2x128xf32, #tpu.memory_space<vmem>>, vector<1x2x128xf32>
    %25 = vector.shape_cast %24 : vector<1x2x128xf32> to vector<2x128xf32>
    %26 = vector.shape_cast %23 : vector<2x128xf32> to vector<1x2x128xf32>
    tpu.vector_store %arg5[%c0_23, %c0_24, %c0_25], %26 {strides = array<i32>} : memref<1x2x128xf32, #tpu.memory_space<vmem>>, vector<1x2x128xf32>,
    %27 = vector.shape_cast %17 : vector<16x128xf32> to vector<2x8x128xf32>
    %28 = vector.extract_strided_slice %27 {offsets = [0, 0, 0], sizes = [2, 8, 64], strides = [1, 1, 1]} : vector<2x8x128xf32> to vector<2x8x64xf32>
    %c0_26 = arith.constant 0 : index
    %c0_27 = arith.constant 0 : index
    %c0_28 = arith.constant 0 : index
    %29 = vector.load %arg3[%c0_26, %c0_27, %c0_28] : memref<2x8x64xf32, #tpu.memory_space<vmem>>, vector<2x8x64xf32>
    tpu.vector_store %arg3[%c0_26, %c0_27, %c0_28], %28 {strides = array<i32>} : memref<2x8x64xf32, #tpu.memory_space<vmem>>, vector<2x8x64xf32>,
    %30 = vector.extract_strided_slice %27 {offsets = [0, 0, 64], sizes = [2, 8, 64], strides = [1, 1, 1]} : vector<2x8x128xf32> to vector<2x8x64xf32>
    %c0_29 = arith.constant 0 : index
    %c0_30 = arith.constant 0 : index
    %c0_31 = arith.constant 0 : index
    %31 = vector.load %arg4[%c0_29, %c0_30, %c0_31] : memref<2x8x64xf32, #tpu.memory_space<vmem>>, vector<2x8x64xf32>
    tpu.vector_store %arg4[%c0_29, %c0_30, %c0_31], %30 {strides = array<i32>} : memref<2x8x64xf32, #tpu.memory_space<vmem>>, vector<2x8x64xf32>,
    return
  }
  func.func @transform_0(%arg0: i32) -> (i32, i32, i32) {
    %c0_i32 = arith.constant 0 : i32
    %c0_i32_0 = arith.constant 0 : i32
    %c0_i32_1 = arith.constant 0 : i32
    return %arg0, %c0_i32, %c0_i32_0 : i32, i32, i32
  }
  func.func @transform_1(%arg0: i32) -> (i32, i32, i32) {
    %c0_i32 = arith.constant 0 : i32
    %c0_i32_0 = arith.constant 0 : i32
    %c0_i32_1 = arith.constant 0 : i32
    %c0_i32_2 = arith.constant 0 : i32
    return %c0_i32, %c0_i32_0, %c0_i32_1 : i32, i32, i32
  }
  func.func @transform_2(%arg0: i32) -> (i32, i32, i32) {
    %c0_i32 = arith.constant 0 : i32
    %c0_i32_0 = arith.constant 0 : i32
    %c0_i32_1 = arith.constant 0 : i32
    return %arg0, %c0_i32, %c0_i32_0 : i32, i32, i32
  }
  func.func @transform_3(%arg0: i32) -> (i32, i32, i32) {
    %c0_i32 = arith.constant 0 : i32
    %c0_i32_0 = arith.constant 0 : i32
    %c0_i32_1 = arith.constant 0 : i32
    return %arg0, %c0_i32, %c0_i32_0 : i32, i32, i32
  }
  func.func @transform_4(%arg0: i32) -> (i32, i32, i32) {
    %c0_i32 = arith.constant 0 : i32
    %c0_i32_0 = arith.constant 0 : i32
    %c0_i32_1 = arith.constant 0 : i32
    return %arg0, %c0_i32, %c0_i32_0 : i32, i32, i32
  }
}

module attributes {stable_mosaic.version = 11 : i64} {
  func.func @_conv_rows_kernel(%arg0: i32, %arg1: memref<2x8x64xf32, #tpu.memory_space<vmem>>, %arg2: memref<1x64xf32, #tpu.memory_space<vmem>>, %arg3: memref<1x64xf32, #tpu.memory_space<vmem>>, %arg4: memref<3x64x64xbf16, #tpu.memory_space<vmem>>, %arg5: memref<2x8x64xf32, #tpu.memory_space<vmem>>, %arg6: memref<1x2x64xf32, #tpu.memory_space<vmem>>, %arg7: memref<2x10x64xf32, #tpu.memory_space<vmem>>) attributes {dimension_semantics = [#tpu.dimension_semantics<parallel>], iteration_bounds = array<i64: 1>, scalar_prefetch = 0 : i64, scratch_operands = 1 : i64, tpu.core_type = #tpu.core_type<tc>, window_params = [{transform_indices = @transform_0, window_bounds = array<i64: 2, 8, 64>}, {pipeline_mode = #tpu.pipeline_mode<synchronous>, transform_indices = @transform_1, window_bounds = array<i64: 1, 64>}, {pipeline_mode = #tpu.pipeline_mode<synchronous>, transform_indices = @transform_2, window_bounds = array<i64: 1, 64>}, {pipeline_mode = #tpu.pipeline_mode<synchronous>, transform_indices = @transform_3, window_bounds = array<i64: 3, 64, 64>}, {transform_indices = @transform_4, window_bounds = array<i64: 2, 8, 64>}, {transform_indices = @transform_5, window_bounds = array<i64: 1, 2, 64>}]} {
    %c0 = arith.constant 0 : index
    %c0_0 = arith.constant 0 : index
    %c0_1 = arith.constant 0 : index
    %0 = vector.load %arg1[%c0, %c0_0, %c0_1] : memref<2x8x64xf32, #tpu.memory_space<vmem>>, vector<2x8x64xf32>
    %c0_2 = arith.constant 0 : index
    %c0_3 = arith.constant 0 : index
    %1 = vector.load %arg2[%c0_2, %c0_3] : memref<1x64xf32, #tpu.memory_space<vmem>>, vector<1x64xf32>
    %2 = vector.shape_cast %1 : vector<1x64xf32> to vector<1x1x64xf32>
    %3 = vector.broadcast %2 : vector<1x1x64xf32> to vector<2x8x64xf32>
    %4 = arith.mulf %0, %3 : vector<2x8x64xf32>
    %c0_4 = arith.constant 0 : index
    %c0_5 = arith.constant 0 : index
    %5 = vector.load %arg3[%c0_4, %c0_5] : memref<1x64xf32, #tpu.memory_space<vmem>>, vector<1x64xf32>
    %6 = vector.shape_cast %5 : vector<1x64xf32> to vector<1x1x64xf32>
    %7 = vector.broadcast %6 : vector<1x1x64xf32> to vector<2x8x64xf32>
    %8 = arith.addf %4, %7 : vector<2x8x64xf32>
    %cst = arith.constant 0.000000e+00 : f32
    %9 = vector.broadcast %cst : f32 to vector<2x8x64xf32>
    %10 = arith.maximumf %8, %9 : vector<2x8x64xf32>
    %cst_6 = arith.constant 0.000000e+00 : f32
    %11 = vector.broadcast %cst_6 : f32 to vector<2x1x64xf32>
    %c0_7 = arith.constant 0 : index
    %c0_8 = arith.constant 0 : index
    %c0_9 = arith.constant 0 : index
    %12 = vector.load %arg7[%c0_7, %c0_8, %c0_9] : memref<2x10x64xf32, #tpu.memory_space<vmem>>, vector<2x1x64xf32>
    tpu.vector_store %arg7[%c0_7, %c0_8, %c0_9], %11 {strides = array<i32>} : memref<2x10x64xf32, #tpu.memory_space<vmem>>, vector<2x1x64xf32>,
    %cst_10 = arith.constant 0.000000e+00 : f32
    %13 = vector.broadcast %cst_10 : f32 to vector<2x1x64xf32>
    %c0_11 = arith.constant 0 : index
    %c9 = arith.constant 9 : index
    %c0_12 = arith.constant 0 : index
    %14 = vector.load %arg7[%c0_11, %c9, %c0_12] : memref<2x10x64xf32, #tpu.memory_space<vmem>>, vector<2x1x64xf32>
    tpu.vector_store %arg7[%c0_11, %c9, %c0_12], %13 {strides = array<i32>} : memref<2x10x64xf32, #tpu.memory_space<vmem>>, vector<2x1x64xf32>,
    %c0_13 = arith.constant 0 : index
    %c1 = arith.constant 1 : index
    %c0_14 = arith.constant 0 : index
    %15 = vector.load %arg7[%c0_13, %c1, %c0_14] : memref<2x10x64xf32, #tpu.memory_space<vmem>>, vector<2x8x64xf32>
    tpu.vector_store %arg7[%c0_13, %c1, %c0_14], %10 {strides = array<i32>} : memref<2x10x64xf32, #tpu.memory_space<vmem>>, vector<2x8x64xf32>,
    %c0_15 = arith.constant 0 : index
    %c0_16 = arith.constant 0 : index
    %c0_17 = arith.constant 0 : index
    %16 = vector.load %arg7[%c0_15, %c0_16, %c0_17] : memref<2x10x64xf32, #tpu.memory_space<vmem>>, vector<2x8x64xf32>
    %17 = arith.truncf %16 : vector<2x8x64xf32> to vector<2x8x64xbf16>
    %18 = vector.shape_cast %17 : vector<2x8x64xbf16> to vector<16x64xbf16>
    %c0_18 = arith.constant 0 : index
    %c0_19 = arith.constant 0 : index
    %c0_20 = arith.constant 0 : index
    %19 = vector.load %arg4[%c0_18, %c0_19, %c0_20] : memref<3x64x64xbf16, #tpu.memory_space<vmem>>, vector<1x64x64xbf16>
    %20 = vector.shape_cast %19 : vector<1x64x64xbf16> to vector<64x64xbf16>
    %cst_21 = arith.constant dense<0.000000e+00> : vector<16x64xf32>
    %21 = tpu.matmul %18, %20, %cst_21 {dimension_numbers = #tpu.dot_dimension_numbers<[1], [0], [0], [1], [0, 0, 1, 1], [], []>} : vector<16x64xbf16>, vector<64x64xbf16>, vector<16x64xf32> -> vector<16x64xf32>
    %c0_22 = arith.constant 0 : index
    %c1_23 = arith.constant 1 : index
    %c0_24 = arith.constant 0 : index
    %22 = vector.load %arg7[%c0_22, %c1_23, %c0_24] : memref<2x10x64xf32, #tpu.memory_space<vmem>>, vector<2x8x64xf32>
    %23 = arith.truncf %22 : vector<2x8x64xf32> to vector<2x8x64xbf16>
    %24 = vector.shape_cast %23 : vector<2x8x64xbf16> to vector<16x64xbf16>
    %c1_25 = arith.constant 1 : index
    %c0_26 = arith.constant 0 : index
    %c0_27 = arith.constant 0 : index
    %25 = vector.load %arg4[%c1_25, %c0_26, %c0_27] : memref<3x64x64xbf16, #tpu.memory_space<vmem>>, vector<1x64x64xbf16>
    %26 = vector.shape_cast %25 : vector<1x64x64xbf16> to vector<64x64xbf16>
    %cst_28 = arith.constant dense<0.000000e+00> : vector<16x64xf32>
    %27 = tpu.matmul %24, %26, %cst_28 {dimension_numbers = #tpu.dot_dimension_numbers<[1], [0], [0], [1], [0, 0, 1, 1], [], []>} : vector<16x64xbf16>, vector<64x64xbf16>, vector<16x64xf32> -> vector<16x64xf32>
    %28 = arith.addf %21, %27 : vector<16x64xf32>
    %c0_29 = arith.constant 0 : index
    %c2 = arith.constant 2 : index
    %c0_30 = arith.constant 0 : index
    %29 = vector.load %arg7[%c0_29, %c2, %c0_30] : memref<2x10x64xf32, #tpu.memory_space<vmem>>, vector<2x8x64xf32>
    %30 = arith.truncf %29 : vector<2x8x64xf32> to vector<2x8x64xbf16>
    %31 = vector.shape_cast %30 : vector<2x8x64xbf16> to vector<16x64xbf16>
    %c2_31 = arith.constant 2 : index
    %c0_32 = arith.constant 0 : index
    %c0_33 = arith.constant 0 : index
    %32 = vector.load %arg4[%c2_31, %c0_32, %c0_33] : memref<3x64x64xbf16, #tpu.memory_space<vmem>>, vector<1x64x64xbf16>
    %33 = vector.shape_cast %32 : vector<1x64x64xbf16> to vector<64x64xbf16>
    %cst_34 = arith.constant dense<0.000000e+00> : vector<16x64xf32>
    %34 = tpu.matmul %31, %33, %cst_34 {dimension_numbers = #tpu.dot_dimension_numbers<[1], [0], [0], [1], [0, 0, 1, 1], [], []>} : vector<16x64xbf16>, vector<64x64xbf16>, vector<16x64xf32> -> vector<16x64xf32>
    %35 = arith.addf %28, %34 : vector<16x64xf32>
    %cst_35 = arith.constant dense<0.000000e+00> : vector<64xf32>
    %36 = vector.multi_reduction <add>, %35, %cst_35 [0] : vector<16x64xf32> to vector<64xf32>
    %37 = vector.shape_cast %36 : vector<64xf32> to vector<1x64xf32>
    %38 = arith.mulf %35, %35 : vector<16x64xf32>
    %cst_36 = arith.constant dense<0.000000e+00> : vector<64xf32>
    %39 = vector.multi_reduction <add>, %38, %cst_36 [0] : vector<16x64xf32> to vector<64xf32>
    %40 = vector.shape_cast %39 : vector<64xf32> to vector<1x64xf32>
    %41 = tpu.concatenate %37, %40 in 0 : vector<1x64xf32>, vector<1x64xf32> -> vector<2x64xf32>
    %c0_37 = arith.constant 0 : index
    %c0_38 = arith.constant 0 : index
    %c0_39 = arith.constant 0 : index
    %42 = vector.load %arg6[%c0_37, %c0_38, %c0_39] : memref<1x2x64xf32, #tpu.memory_space<vmem>>, vector<1x2x64xf32>
    %43 = vector.shape_cast %42 : vector<1x2x64xf32> to vector<2x64xf32>
    %44 = vector.shape_cast %41 : vector<2x64xf32> to vector<1x2x64xf32>
    tpu.vector_store %arg6[%c0_37, %c0_38, %c0_39], %44 {strides = array<i32>} : memref<1x2x64xf32, #tpu.memory_space<vmem>>, vector<1x2x64xf32>,
    %45 = vector.shape_cast %35 : vector<16x64xf32> to vector<2x8x64xf32>
    %c0_40 = arith.constant 0 : index
    %c0_41 = arith.constant 0 : index
    %c0_42 = arith.constant 0 : index
    %46 = vector.load %arg5[%c0_40, %c0_41, %c0_42] : memref<2x8x64xf32, #tpu.memory_space<vmem>>, vector<2x8x64xf32>
    tpu.vector_store %arg5[%c0_40, %c0_41, %c0_42], %45 {strides = array<i32>} : memref<2x8x64xf32, #tpu.memory_space<vmem>>, vector<2x8x64xf32>,
    return
  }
  func.func @transform_0(%arg0: i32) -> (i32, i32, i32) {
    %c0_i32 = arith.constant 0 : i32
    %c0_i32_0 = arith.constant 0 : i32
    %c0_i32_1 = arith.constant 0 : i32
    return %arg0, %c0_i32, %c0_i32_0 : i32, i32, i32
  }
  func.func @transform_1(%arg0: i32) -> (i32, i32) {
    %c0_i32 = arith.constant 0 : i32
    %c0_i32_0 = arith.constant 0 : i32
    %c0_i32_1 = arith.constant 0 : i32
    return %c0_i32, %c0_i32_0 : i32, i32
  }
  func.func @transform_2(%arg0: i32) -> (i32, i32) {
    %c0_i32 = arith.constant 0 : i32
    %c0_i32_0 = arith.constant 0 : i32
    %c0_i32_1 = arith.constant 0 : i32
    return %c0_i32, %c0_i32_0 : i32, i32
  }
  func.func @transform_3(%arg0: i32) -> (i32, i32, i32) {
    %c0_i32 = arith.constant 0 : i32
    %c0_i32_0 = arith.constant 0 : i32
    %c0_i32_1 = arith.constant 0 : i32
    %c0_i32_2 = arith.constant 0 : i32
    return %c0_i32, %c0_i32_0, %c0_i32_1 : i32, i32, i32
  }
  func.func @transform_4(%arg0: i32) -> (i32, i32, i32) {
    %c0_i32 = arith.constant 0 : i32
    %c0_i32_0 = arith.constant 0 : i32
    %c0_i32_1 = arith.constant 0 : i32
    return %arg0, %c0_i32, %c0_i32_0 : i32, i32, i32
  }
  func.func @transform_5(%arg0: i32) -> (i32, i32, i32) {
    %c0_i32 = arith.constant 0 : i32
    %c0_i32_0 = arith.constant 0 : i32
    %c0_i32_1 = arith.constant 0 : i32
    return %arg0, %c0_i32, %c0_i32_0 : i32, i32, i32
  }
}

module attributes {stable_mosaic.version = 11 : i64} {
  func.func @_epilogue_kernel(%arg0: i32, %arg1: memref<2x4x128xf32, #tpu.memory_space<vmem>>, %arg2: memref<2x4x128xf32, #tpu.memory_space<vmem>>, %arg3: memref<1x128xf32, #tpu.memory_space<vmem>>, %arg4: memref<1x128xf32, #tpu.memory_space<vmem>>, %arg5: memref<1x128xf32, #tpu.memory_space<vmem>>, %arg6: memref<1x128xf32, #tpu.memory_space<vmem>>, %arg7: memref<2x4x128xf32, #tpu.memory_space<vmem>>) attributes {dimension_semantics = [#tpu.dimension_semantics<parallel>], iteration_bounds = array<i64: 1>, scalar_prefetch = 0 : i64, scratch_operands = 0 : i64, tpu.core_type = #tpu.core_type<tc>, window_params = [{transform_indices = @transform_0, window_bounds = array<i64: 2, 4, 128>}, {transform_indices = @transform_1, window_bounds = array<i64: 2, 4, 128>}, {pipeline_mode = #tpu.pipeline_mode<synchronous>, transform_indices = @transform_2, window_bounds = array<i64: 1, 128>}, {pipeline_mode = #tpu.pipeline_mode<synchronous>, transform_indices = @transform_3, window_bounds = array<i64: 1, 128>}, {pipeline_mode = #tpu.pipeline_mode<synchronous>, transform_indices = @transform_4, window_bounds = array<i64: 1, 128>}, {pipeline_mode = #tpu.pipeline_mode<synchronous>, transform_indices = @transform_5, window_bounds = array<i64: 1, 128>}, {transform_indices = @transform_6, window_bounds = array<i64: 2, 4, 128>}]} {
    %c0 = arith.constant 0 : index
    %c0_0 = arith.constant 0 : index
    %c0_1 = arith.constant 0 : index
    %0 = vector.load %arg1[%c0, %c0_0, %c0_1] : memref<2x4x128xf32, #tpu.memory_space<vmem>>, vector<2x4x128xf32>
    %c0_2 = arith.constant 0 : index
    %c0_3 = arith.constant 0 : index
    %1 = vector.load %arg3[%c0_2, %c0_3] : memref<1x128xf32, #tpu.memory_space<vmem>>, vector<1x128xf32>
    %2 = vector.shape_cast %1 : vector<1x128xf32> to vector<1x1x128xf32>
    %3 = vector.broadcast %2 : vector<1x1x128xf32> to vector<2x4x128xf32>
    %4 = arith.mulf %0, %3 : vector<2x4x128xf32>
    %c0_4 = arith.constant 0 : index
    %c0_5 = arith.constant 0 : index
    %5 = vector.load %arg4[%c0_4, %c0_5] : memref<1x128xf32, #tpu.memory_space<vmem>>, vector<1x128xf32>
    %6 = vector.shape_cast %5 : vector<1x128xf32> to vector<1x1x128xf32>
    %7 = vector.broadcast %6 : vector<1x1x128xf32> to vector<2x4x128xf32>
    %8 = arith.addf %4, %7 : vector<2x4x128xf32>
    %c0_6 = arith.constant 0 : index
    %c0_7 = arith.constant 0 : index
    %c0_8 = arith.constant 0 : index
    %9 = vector.load %arg2[%c0_6, %c0_7, %c0_8] : memref<2x4x128xf32, #tpu.memory_space<vmem>>, vector<2x4x128xf32>
    %c0_9 = arith.constant 0 : index
    %c0_10 = arith.constant 0 : index
    %10 = vector.load %arg5[%c0_9, %c0_10] : memref<1x128xf32, #tpu.memory_space<vmem>>, vector<1x128xf32>
    %11 = vector.shape_cast %10 : vector<1x128xf32> to vector<1x1x128xf32>
    %12 = vector.broadcast %11 : vector<1x1x128xf32> to vector<2x4x128xf32>
    %13 = arith.mulf %9, %12 : vector<2x4x128xf32>
    %14 = arith.addf %8, %13 : vector<2x4x128xf32>
    %c0_11 = arith.constant 0 : index
    %c0_12 = arith.constant 0 : index
    %15 = vector.load %arg6[%c0_11, %c0_12] : memref<1x128xf32, #tpu.memory_space<vmem>>, vector<1x128xf32>
    %16 = vector.shape_cast %15 : vector<1x128xf32> to vector<1x1x128xf32>
    %17 = vector.broadcast %16 : vector<1x1x128xf32> to vector<2x4x128xf32>
    %18 = arith.addf %14, %17 : vector<2x4x128xf32>
    %cst = arith.constant 0.000000e+00 : f32
    %19 = vector.broadcast %cst : f32 to vector<2x4x128xf32>
    %20 = arith.maximumf %18, %19 : vector<2x4x128xf32>
    %c0_13 = arith.constant 0 : index
    %c0_14 = arith.constant 0 : index
    %c0_15 = arith.constant 0 : index
    %21 = vector.load %arg7[%c0_13, %c0_14, %c0_15] : memref<2x4x128xf32, #tpu.memory_space<vmem>>, vector<2x4x128xf32>
    tpu.vector_store %arg7[%c0_13, %c0_14, %c0_15], %20 {strides = array<i32>} : memref<2x4x128xf32, #tpu.memory_space<vmem>>, vector<2x4x128xf32>,
    return
  }
  func.func @transform_0(%arg0: i32) -> (i32, i32, i32) {
    %c0_i32 = arith.constant 0 : i32
    %c0_i32_0 = arith.constant 0 : i32
    %c0_i32_1 = arith.constant 0 : i32
    return %arg0, %c0_i32, %c0_i32_0 : i32, i32, i32
  }
  func.func @transform_1(%arg0: i32) -> (i32, i32, i32) {
    %c0_i32 = arith.constant 0 : i32
    %c0_i32_0 = arith.constant 0 : i32
    %c0_i32_1 = arith.constant 0 : i32
    return %arg0, %c0_i32, %c0_i32_0 : i32, i32, i32
  }
  func.func @transform_2(%arg0: i32) -> (i32, i32) {
    %c0_i32 = arith.constant 0 : i32
    %c0_i32_0 = arith.constant 0 : i32
    %c0_i32_1 = arith.constant 0 : i32
    return %c0_i32, %c0_i32_0 : i32, i32
  }
  func.func @transform_3(%arg0: i32) -> (i32, i32) {
    %c0_i32 = arith.constant 0 : i32
    %c0_i32_0 = arith.constant 0 : i32
    %c0_i32_1 = arith.constant 0 : i32
    return %c0_i32, %c0_i32_0 : i32, i32
  }
  func.func @transform_4(%arg0: i32) -> (i32, i32) {
    %c0_i32 = arith.constant 0 : i32
    %c0_i32_0 = arith.constant 0 : i32
    %c0_i32_1 = arith.constant 0 : i32
    return %c0_i32, %c0_i32_0 : i32, i32
  }
  func.func @transform_5(%arg0: i32) -> (i32, i32) {
    %c0_i32 = arith.constant 0 : i32
    %c0_i32_0 = arith.constant 0 : i32
    %c0_i32_1 = arith.constant 0 : i32
    return %c0_i32, %c0_i32_0 : i32, i32
  }
  func.func @transform_6(%arg0: i32) -> (i32, i32, i32) {
    %c0_i32 = arith.constant 0 : i32
    %c0_i32_0 = arith.constant 0 : i32
    %c0_i32_1 = arith.constant 0 : i32
    return %arg0, %c0_i32, %c0_i32_0 : i32, i32, i32
  }
}

</mosaic_0001>

<llo_original>
// kernel: tile.58
$region0: #{tile.58}
  #allocation0 [shape = 's32[1]{0}', space=sflag, size = 0x4, scoped, tag = 'scoped memory for tile.58']
  %s0 = inlined_call_operand.vmem [shape: f32[8], index: 0, kind: input, shape index: {}]
  %s1 = inlined_call_operand.vmem [shape: f32[16,8], index: 1, kind: output, shape index: {}]
  // Predicated region
  $region2: #{tile.58} parent=0 // pred_check
    _
  $region3: #{tile.58} parent=0 // pred_check_branch
    %3 = sbr.rel (0) target = $region5
  $region4: #{tile.58} parent=0 // pred_region
    _
  $region5: #{tile.58} parent=0 // pred_fallthru
    _
  %v4 = vld [vmem:[%s0] ss:$0 sm:$0xff]
  %5 = vst [vmem:[%s1] sm:$0xff] %v4
  %s6 = scalar_lea.vmem %s1, 8
  %7 = vst [vmem:[%s6] sm:$0xff] %v4

// kernel: tile.59
$region0: #{tile.59}
  %s0 = inlined_call_operand.vmem [shape: f32[16,8], index: 0, kind: input, shape index: {}]
  %s1 = inlined_call_operand.vmem [shape: f32[1,128], index: 1, kind: output, shape index: {}]
  $region1: #{tile.59} parent=0
    #allocation0 [shape = 'u8[4096]{0}', space=vmem, size = 0x1000, scoped, tag = 'scoped mem for output reshape']
    %v2 = vld [vmem:[%s0] sm:$0x1]
    %vm3 = vcmask 64512
    %4 = vst.msk [vmem:[#allocation0] sm:$0x1] %vm3, %v2
    %s5 = scalar_lea.vmem %s0, 15
    %v6 = vld [vmem:[%s5] sm:$0x1]
    %7 = vrot.lane.b32.xlu0 %v6, 120
    %v8 = vpop.permute.xlu0 %7
    %vm9 = vcmask 1048512
    %10 = vst.msk [vmem:[#allocation0] sm:$0x1] %vm9, %v8
    %s11 = scalar_lea.vmem %s0, 14
    %v12 = vld [vmem:[%s11] sm:$0x1]
    %13 = vrot.lane.b32.xlu0 %v12, 112
    %v14 = vpop.permute.xlu0 %13
    %vm15 = vcmask 982912
    %16 = vst.msk [vmem:[#allocation0] sm:$0x1] %vm15, %v14
    %s17 = scalar_lea.vmem %s0, 13
    %v18 = vld [vmem:[%s17] sm:$0x1]
    %19 = vrot.lane.b32.xlu0 %v18, 104
    %v20 = vpop.permute.xlu0 %19
    %vm21 = vcmask 917312
    %22 = vst.msk [vmem:[#allocation0] sm:$0x1] %vm21, %v20
    %s23 = scalar_lea.vmem %s0, 12
    %v24 = vld [vmem:[%s23] sm:$0x1]
    %25 = vrot.lane.b32.xlu0 %v24, 96
    %v26 = vpop.permute.xlu0 %25
    %vm27 = vcmask 851712
    %28 = vst.msk [vmem:[#allocation0] sm:$0x1] %vm27, %v26
    %s29 = scalar_lea.vmem %s0, 11
    %v30 = vld [vmem:[%s29] sm:$0x1]
    %31 = vrot.lane.b32.xlu0 %v30, 88
    %v32 = vpop.permute.xlu0 %31
    %vm33 = vcmask 786112
    %34 = vst.msk [vmem:[#allocation0] sm:$0x1] %vm33, %v32
    %s35 = scalar_lea.vmem %s0, 10
    %v36 = vld [vmem:[%s35] sm:$0x1]
    %37 = vrot.lane.b32.xlu0 %v36, 80
    %v38 = vpop.permute.xlu0 %37
    %vm39 = vcmask 720512
    %40 = vst.msk [vmem:[#allocation0] sm:$0x1] %vm39, %v38
    %s41 = scalar_lea.vmem %s0, 9
    %v42 = vld [vmem:[%s41] sm:$0x1]
    %43 = vrot.lane.b32.xlu0 %v42, 72
    %v44 = vpop.permute.xlu0 %43
    %vm45 = vcmask 654912
    %46 = vst.msk [vmem:[#allocation0] sm:$0x1] %vm45, %v44
    %s47 = scalar_lea.vmem %s0, 8
    %v48 = vld [vmem:[%s47] sm:$0x1]
    %49 = vrot.lane.b32.xlu0 %v48, 64
    %v50 = vpop.permute.xlu0 %49
    %vm51 = vcmask 589312
    %52 = vst.msk [vmem:[#allocation0] sm:$0x1] %vm51, %v50
    %s53 = scalar_lea.vmem %s0, 7
    %v54 = vld [vmem:[%s53] sm:$0x1]
    %55 = vrot.lane.b32.xlu0 %v54, 56
    %v56 = vpop.permute.xlu0 %55
    %vm57 = vcmask 523712
    %58 = vst.msk [vmem:[#allocation0] sm:$0x1] %vm57, %v56
    %s59 = scalar_lea.vmem %s0, 6
    %v60 = vld [vmem:[%s59] sm:$0x1]
    %61 = vrot.lane.b32.xlu0 %v60, 48
    %v62 = vpop.permute.xlu0 %61
    %vm63 = vcmask 458112
    %64 = vst.msk [vmem:[#allocation0] sm:$0x1] %vm63, %v62
    %s65 = scalar_lea.vmem %s0, 5
    %v66 = vld [vmem:[%s65] sm:$0x1]
    %67 = vrot.lane.b32.xlu0 %v66, 40
    %v68 = vpop.permute.xlu0 %67
    %vm69 = vcmask 392512
    %70 = vst.msk [vmem:[#allocation0] sm:$0x1] %vm69, %v68
    %s71 = scalar_lea.vmem %s0, 4
    %v72 = vld [vmem:[%s71] sm:$0x1]
    %73 = vrot.lane.b32.xlu0 %v72, 32
    %v74 = vpop.permute.xlu0 %73
    %vm75 = vcmask 326912
    %76 = vst.msk [vmem:[#allocation0] sm:$0x1] %vm75, %v74
    %s77 = scalar_lea.vmem %s0, 3
    %v78 = vld [vmem:[%s77] sm:$0x1]
    %79 = vrot.lane.b32.xlu0 %v78, 24
    %v80 = vpop.permute.xlu0 %79
    %vm81 = vcmask 261312
    %82 = vst.msk [vmem:[#allocation0] sm:$0x1] %vm81, %v80
    %s83 = scalar_lea.vmem %s0, 2
    %v84 = vld [vmem:[%s83] sm:$0x1]
    %85 = vrot.lane.b32.xlu0 %v84, 16
    %v86 = vpop.permute.xlu0 %85
    %vm87 = vcmask 195712
    %88 = vst.msk [vmem:[#allocation0] sm:$0x1] %vm87, %v86
    %s89 = scalar_lea.vmem %s0, 1
    %v90 = vld [vmem:[%s89] sm:$0x1]
    %91 = vrot.lane.b32.xlu0 %v90, 8
    %v92 = vpop.permute.xlu0 %91
    %vm93 = vcmask 130112
    %94 = vst.msk [vmem:[#allocation0] sm:$0x1] %vm93, %v92
    %s96 = sshll.u32 1, 1
    %s97 = ssub.s32 %s96, 1
    %v99 = vld [vmem:[#allocation0] sm:%s97]
    %s100 = sshll.u32 1, 1
    %s101 = ssub.s32 %s100, 1
    %102 = vst [vmem:[%s1] sm:%s101] %v99

// kernel: tile.38
$region0: #{tile.38}
  #allocation0 [shape = 's32[1]{0}', space=sflag, size = 0x4, scoped, tag = 'scoped memory for tile.38']
  %s0 = inlined_call_operand.vmem [shape: f32[8], index: 0, kind: input, shape index: {}]
  %s1 = inlined_call_operand.vmem [shape: f32[8,8], index: 1, kind: output, shape index: {}]
  // Predicated region
  $region2: #{tile.38} parent=0 // pred_check
    _
  $region3: #{tile.38} parent=0 // pred_check_branch
    %3 = sbr.rel (0) target = $region5
  $region4: #{tile.38} parent=0 // pred_region
    _
  $region5: #{tile.38} parent=0 // pred_fallthru
    _
  %v4 = vld [vmem:[%s0] ss:$0 sm:$0xff]
  %5 = vst [vmem:[%s1] sm:$0xff] %v4

// kernel: tile.39
$region0: #{tile.39}
  %s0 = inlined_call_operand.vmem [shape: f32[8,8], index: 0, kind: input, shape index: {}]
  %s1 = inlined_call_operand.vmem [shape: f32[1,64], index: 1, kind: output, shape index: {}]
  $region1: #{tile.39} parent=0
    #allocation0 [shape = 'u8[4096]{0}', space=vmem, size = 0x1000, scoped, tag = 'scoped mem for output reshape']
    %v2 = vld [vmem:[%s0] sm:$0x1]
    %vm3 = vcmask 64512
    %4 = vst.msk [vmem:[#allocation0] sm:$0x1] %vm3, %v2
    %s5 = scalar_lea.vmem %s0, 7
    %v6 = vld [vmem:[%s5] sm:$0x1]
    %7 = vrot.lane.b32.xlu0 %v6, 56
    %v8 = vpop.permute.xlu0 %7
    %vm9 = vcmask 523712
    %10 = vst.msk [vmem:[#allocation0] sm:$0x1] %vm9, %v8
    %s11 = scalar_lea.vmem %s0, 6
    %v12 = vld [vmem:[%s11] sm:$0x1]
    %13 = vrot.lane.b32.xlu0 %v12, 48
    %v14 = vpop.permute.xlu0 %13
    %vm15 = vcmask 458112
    %16 = vst.msk [vmem:[#allocation0] sm:$0x1] %vm15, %v14
    %s17 = scalar_lea.vmem %s0, 5
    %v18 = vld [vmem:[%s17] sm:$0x1]
    %19 = vrot.lane.b32.xlu0 %v18, 40
    %v20 = vpop.permute.xlu0 %19
    %vm21 = vcmask 392512
    %22 = vst.msk [vmem:[#allocation0] sm:$0x1] %vm21, %v20
    %s23 = scalar_lea.vmem %s0, 4
    %v24 = vld [vmem:[%s23] sm:$0x1]
    %25 = vrot.lane.b32.xlu0 %v24, 32
    %v26 = vpop.permute.xlu0 %25
    %vm27 = vcmask 326912
    %28 = vst.msk [vmem:[#allocation0] sm:$0x1] %vm27, %v26
    %s29 = scalar_lea.vmem %s0, 3
    %v30 = vld [vmem:[%s29] sm:$0x1]
    %31 = vrot.lane.b32.xlu0 %v30, 24
    %v32 = vpop.permute.xlu0 %31
    %vm33 = vcmask 261312
    %34 = vst.msk [vmem:[#allocation0] sm:$0x1] %vm33, %v32
    %s35 = scalar_lea.vmem %s0, 2
    %v36 = vld [vmem:[%s35] sm:$0x1]
    %37 = vrot.lane.b32.xlu0 %v36, 16
    %v38 = vpop.permute.xlu0 %37
    %vm39 = vcmask 195712
    %40 = vst.msk [vmem:[#allocation0] sm:$0x1] %vm39, %v38
    %s41 = scalar_lea.vmem %s0, 1
    %v42 = vld [vmem:[%s41] sm:$0x1]
    %43 = vrot.lane.b32.xlu0 %v42, 8
    %v44 = vpop.permute.xlu0 %43
    %vm45 = vcmask 130112
    %46 = vst.msk [vmem:[#allocation0] sm:$0x1] %vm45, %v44
    %s48 = sshll.u32 1, 1
    %s49 = ssub.s32 %s48, 1
    %v51 = vld [vmem:[#allocation0] sm:%s49]
    %s52 = sshll.u32 1, 1
    %s53 = ssub.s32 %s52, 1
    %54 = vst [vmem:[%s1] sm:%s53] %v51

// kernel: block_forward.5
$region0: #{block_forward.5}
  #allocation0 [shape = 'u32[]', space=smem, size = 0x4, offset = 0x4, fixed_abs, tag = 'smem constant byte address 0x4 - core index']
  #allocation1 [shape = 'u32[144,128]{1,0:T(1,128)}', space=vmem, size = 0x12000, scoped, tag = 'internal scratch']
  %s0 = inlined_call_operand.vmem [shape: f32[2,4,128], index: 0, kind: input, shape index: {}]
  %s1 = inlined_call_operand.vmem [shape: f32[2,4,128], index: 1, kind: input, shape index: {}]
  %s2 = inlined_call_operand.vmem [shape: f32[1,128], index: 2, kind: input, shape index: {}]
  %s3 = inlined_call_operand.vmem [shape: f32[1,128], index: 3, kind: input, shape index: {}]
  %s4 = inlined_call_operand.vmem [shape: f32[1,128], index: 4, kind: input, shape index: {}]
  %s5 = inlined_call_operand.vmem [shape: f32[1,128], index: 5, kind: input, shape index: {}]
  %s6 = inlined_call_operand.vmem [shape: f32[2,4,128], index: 6, kind: output, shape index: {}]
  %s7 = sld [smem:[#allocation0]]
  $region34: #{block_forward.5} parent=0
    _
  %s9 = ssub.s32 1, %s7
  %s10 = scalar_select 0, %s9, %s7
  // Predicated region
  $region2: #{block_forward.5} parent=0 // pred_check
    _
  $region3: #{block_forward.5} parent=0 // pred_check_branch
    %12 = sbr.rel (0) target = $region5
  $region4: #{block_forward.5} parent=0 // pred_region
    _
  $region5: #{block_forward.5} parent=0 // pred_fallthru
    _
  // Predicated region
  $region6: #{block_forward.5} parent=0 // pred_check
    _
  $region7: #{block_forward.5} parent=0 // pred_check_branch
    %14 = sbr.rel (0) target = $region9
  $region8: #{block_forward.5} parent=0 // pred_region
    _
  $region9: #{block_forward.5} parent=0 // pred_fallthru
    _
  // Predicated region
  $region10: #{block_forward.5} parent=0 // pred_check
    _
  $region11: #{block_forward.5} parent=0 // pred_check_branch
    %16 = sbr.rel (0) target = $region13
  $region12: #{block_forward.5} parent=0 // pred_region
    _
  $region13: #{block_forward.5} parent=0 // pred_fallthru
    _
  // Predicated region
  $region14: #{block_forward.5} parent=0 // pred_check
    _
  $region15: #{block_forward.5} parent=0 // pred_check_branch
    %18 = sbr.rel (0) target = $region17
  $region16: #{block_forward.5} parent=0 // pred_region
    _
  $region17: #{block_forward.5} parent=0 // pred_fallthru
    _
  // Predicated region
  $region18: #{block_forward.5} parent=0 // pred_check
    _
  $region19: #{block_forward.5} parent=0 // pred_check_branch
    %20 = sbr.rel (0) target = $region21
  $region20: #{block_forward.5} parent=0 // pred_region
    _
  $region21: #{block_forward.5} parent=0 // pred_fallthru
    _
  // Predicated region
  $region22: #{block_forward.5} parent=0 // pred_check
    _
  $region23: #{block_forward.5} parent=0 // pred_check_branch
    %22 = sbr.rel (0) target = $region25
  $region24: #{block_forward.5} parent=0 // pred_region
    _
  $region25: #{block_forward.5} parent=0 // pred_fallthru
    _
  %v23 = vld [vmem:[%s0] sm:$0xf]
  %v24 = vld [vmem:[%s0 + $0x4] sm:$0xf]
  %v25 = vld [vmem:[%s2] sm:$0x1]
  %v27 = vlaneseq
  %v28 = vshrl.u32 %v27, 7
  %v29 = vsub.s32 0, %v28
  %v30 = vrot.slane %v25, %v29
  %v32 = vmul.f32 %v23, %v30
  %v33 = vmul.f32 %v24, %v30
  %v34 = vld [vmem:[%s3] sm:$0x1]
  %v36 = vlaneseq
  %v37 = vshrl.u32 %v36, 7
  %v38 = vsub.s32 0, %v37
  %v39 = vrot.slane %v34, %v38
  %v41 = vadd.f32 %v32, %v39
  %v42 = vadd.f32 %v33, %v39
  %v43 = vld [vmem:[%s1] sm:$0xf]
  %v44 = vld [vmem:[%s1 + $0x4] sm:$0xf]
  %v45 = vld [vmem:[%s4] sm:$0x1]
  %v47 = vlaneseq
  %v48 = vshrl.u32 %v47, 7
  %v49 = vsub.s32 0, %v48
  %v50 = vrot.slane %v45, %v49
  %v52 = vmul.f32 %v43, %v50
  %v53 = vmul.f32 %v44, %v50
  %v54 = vadd.f32 %v41, %v52
  %v55 = vadd.f32 %v42, %v53
  %v56 = vld [vmem:[%s5] sm:$0x1]
  %v58 = vlaneseq
  %v59 = vshrl.u32 %v58, 7
  %v60 = vsub.s32 0, %v59
  %v61 = vrot.slane %v56, %v60
  %v63 = vadd.f32 %v54, %v61
  %v64 = vadd.f32 %v55, %v61
  %v65 = vmax.f32 %v63, 0.0
  %v66 = vmax.f32 %v64, 0.0
  %67 = vst [vmem:[%s6] sm:$0xf] %v65
  %68 = vst [vmem:[%s6 + $0x4] sm:$0xf] %v66
  // Predicated region
  $region26: #{block_forward.5} parent=0 // pred_check
    _
  $region27: #{block_forward.5} parent=0 // pred_check_branch
    %70 = sbr.rel (0) target = $region29
  $region28: #{block_forward.5} parent=0 // pred_region
    _
  $region29: #{block_forward.5} parent=0 // pred_fallthru
    _
  // Predicated region
  $region30: #{block_forward.5} parent=0 // pred_check
    _
  $region31: #{block_forward.5} parent=0 // pred_check_branch
    %72 = sbr.rel (0) target = $region33
  $region32: #{block_forward.5} parent=0 // pred_region
    _
  $region33: #{block_forward.5} parent=0 // pred_fallthru
    _

// kernel: block_forward.3
$region0: #{block_forward.3}
  #allocation0 [shape = 'u32[]', space=smem, size = 0x4, offset = 0x4, fixed_abs, tag = 'smem constant byte address 0x4 - core index']
  #allocation1 [shape = 'u32[144,128]{1,0:T(1,128)}', space=vmem, size = 0x12000, scoped, tag = 'internal scratch']
  #allocation2 [shape = 'f32[2,9,128]{2,1,0:T(8,128)}', space=vmem, size = 0x4000, scoped, tag = 'scratch operand']
  %s0 = inlined_call_operand.vmem [shape: bf16[2,8,128], index: 0, kind: input, shape index: {}]
  %s1 = inlined_call_operand.vmem [shape: bf16[2,128,128], index: 1, kind: input, shape index: {}]
  %s2 = inlined_call_operand.vmem [shape: f32[2,8,64], index: 2, kind: output, shape index: {0}]
  %s3 = inlined_call_operand.vmem [shape: f32[2,8,64], index: 3, kind: output, shape index: {1}]
  %s4 = inlined_call_operand.vmem [shape: f32[1,2,128], index: 4, kind: output, shape index: {2}]
  %5 = xla_tuple %s2, %s3, %s4
  %s6 = sld [smem:[#allocation0]]
  $region34: #{block_forward.3} parent=0
    _
  %s8 = ssub.s32 1, %s6
  %s9 = scalar_select 0, %s8, %s6
  // Predicated region
  $region2: #{block_forward.3} parent=0 // pred_check
    _
  $region3: #{block_forward.3} parent=0 // pred_check_branch
    %11 = sbr.rel (0) target = $region5
  $region4: #{block_forward.3} parent=0 // pred_region
    _
  $region5: #{block_forward.3} parent=0 // pred_fallthru
    _
  // Predicated region
  $region6: #{block_forward.3} parent=0 // pred_check
    _
  $region7: #{block_forward.3} parent=0 // pred_check_branch
    %13 = sbr.rel (0) target = $region9
  $region8: #{block_forward.3} parent=0 // pred_region
    _
  $region9: #{block_forward.3} parent=0 // pred_fallthru
    _
  %v15 = vld [vmem:[%s0] sm:$0xf]
  %v16 = vld [vmem:[%s0 + $0x4] sm:$0xf]
  %17 = vst [vmem:[#allocation2] sm:$0x1] 0.0
  %18 = vst [vmem:[#allocation2 + $0x10] sm:$0x1] 0.0
  %v19 = vunpack.c.l.bf16 %v15
  %v20 = vunpack.c.l.bf16 %v16
  %21 = vst [vmem:[#allocation2 + $0x1] sm:$0xff] %v19
  %22 = vst [vmem:[#allocation2 + $0x11] sm:$0xff] %v20
  %v23 = vld [vmem:[#allocation2] sm:$0xff]
  %v24 = vld [vmem:[#allocation2 + $0x10] sm:$0xff]
  %v25 = vpack.c.bf16 %v23, %v23
  %v26 = vpack.c.bf16 %v24, %v24
  %v27 = vld [vmem:[%s1] sm:$0xf]
  %v28 = vld [vmem:[%s1 + $0x4] sm:$0xf]
  %v29 = vld [vmem:[%s1 + $0x8] sm:$0xf]
  %v30 = vld [vmem:[%s1 + $0xc] sm:$0xf]
  %v31 = vld [vmem:[%s1 + $0x10] sm:$0xf]
  %v32 = vld [vmem:[%s1 + $0x14] sm:$0xf]
  %v33 = vld [vmem:[%s1 + $0x18] sm:$0xf]
  %v34 = vld [vmem:[%s1 + $0x1c] sm:$0xf]
  %v35 = vld [vmem:[%s1 + $0x20] sm:$0xf]
  %v36 = vld [vmem:[%s1 + $0x24] sm:$0xf]
  %v37 = vld [vmem:[%s1 + $0x28] sm:$0xf]
  %v38 = vld [vmem:[%s1 + $0x2c] sm:$0xf]
  %v39 = vld [vmem:[%s1 + $0x30] sm:$0xf]
  %v40 = vld [vmem:[%s1 + $0x34] sm:$0xf]
  %v41 = vld [vmem:[%s1 + $0x38] sm:$0xf]
  %v42 = vld [vmem:[%s1 + $0x3c] sm:$0xf]
  %v43 = vld [vmem:[#allocation2 + $0x1] sm:$0xff]
  %v44 = vld [vmem:[#allocation2 + $0x11] sm:$0xff]
  %v45 = vpack.c.bf16 %v43, %v43
  %v46 = vpack.c.bf16 %v44, %v44
  %s47 = scalar_lea.vmem %s1, 64
  %v48 = vld [vmem:[%s47] sm:$0xf]
  %v49 = vld [vmem:[%s47 + $0x4] sm:$0xf]
  %v50 = vld [vmem:[%s47 + $0x8] sm:$0xf]
  %v51 = vld [vmem:[%s47 + $0xc] sm:$0xf]
  %v52 = vld [vmem:[%s47 + $0x10] sm:$0xf]
  %v53 = vld [vmem:[%s47 + $0x14] sm:$0xf]
  %v54 = vld [vmem:[%s47 + $0x18] sm:$0xf]
  %v55 = vld [vmem:[%s47 + $0x1c] sm:$0xf]
  %v56 = vld [vmem:[%s47 + $0x20] sm:$0xf]
  %v57 = vld [vmem:[%s47 + $0x24] sm:$0xf]
  %v58 = vld [vmem:[%s47 + $0x28] sm:$0xf]
  %v59 = vld [vmem:[%s47 + $0x2c] sm:$0xf]
  %v60 = vld [vmem:[%s47 + $0x30] sm:$0xf]
  %v61 = vld [vmem:[%s47 + $0x34] sm:$0xf]
  %v62 = vld [vmem:[%s47 + $0x38] sm:$0xf]
  %v63 = vld [vmem:[%s47 + $0x3c] sm:$0xf]
  %v66 = vunpack.c.l.b16 %v45
  %v67 = vunpack.c.l.b16 %v46
  %v68 = vpack.c.b16 %v67, %v66
  %v86 = vunpack.c.l.b16 %v48
  %v87 = vunpack.c.l.b16 %v49
  %v88 = vunpack.c.l.b16 %v50
  %v89 = vunpack.c.l.b16 %v51
  %v90 = vunpack.c.l.b16 %v52
  %v91 = vunpack.c.l.b16 %v53
  %v92 = vunpack.c.l.b16 %v54
  %v93 = vunpack.c.l.b16 %v55
  %v94 = vunpack.c.l.b16 %v56
  %v95 = vunpack.c.l.b16 %v57
  %v96 = vunpack.c.l.b16 %v58
  %v97 = vunpack.c.l.b16 %v59
  %v98 = vunpack.c.l.b16 %v60
  %v99 = vunpack.c.l.b16 %v61
  %v100 = vunpack.c.l.b16 %v62
  %v101 = vunpack.c.l.b16 %v63
  %v102 = vpack.c.b16 %v87, %v86
  %v103 = vpack.c.b16 %v89, %v88
  %v104 = vpack.c.b16 %v91, %v90
  %v105 = vpack.c.b16 %v93, %v92
  %v106 = vpack.c.b16 %v95, %v94
  %v107 = vpack.c.b16 %v97, %v96
  %v108 = vpack.c.b16 %v99, %v98
  %v109 = vpack.c.b16 %v101, %v100
  %118 = vmatprep.subr.bf16.mxu0 0
  %119 = vmatpush1.bf16.msra.mxu0 %v109
  %120 = vmatprep.subr.bf16.mxu0 0
  %121 = vmatpush1.bf16.msra.mxu0 %v108
  %122 = vmatprep.subr.bf16.mxu0 0
  %123 = vmatpush1.bf16.msra.mxu0 %v107
  %124 = vmatprep.subr.bf16.mxu0 0
  %125 = vmatpush1.bf16.msra.mxu0 %v106
  %126 = vmatprep.subr.bf16.mxu0 0
  %127 = vmatpush1.bf16.msra.mxu0 %v105
  %128 = vmatprep.subr.bf16.mxu0 0
  %129 = vmatpush1.bf16.msra.mxu0 %v104
  %130 = vmatprep.subr.bf16.mxu0 0
  %131 = vmatpush1.bf16.msra.mxu0 %v103
  %132 = vmatprep.subr.bf16.mxu0 0
  %133 = vmatpush1.bf16.msra.mxu0 %v102
  %134 = vmatprep.subr.bf16.mxu0 0
  %135 = vmatpush2.bf16.msra.mxu0 0
  %136 = vmatprep.subr.bf16.mxu0 0
  %137 = vmatpush2.bf16.msra.mxu0 0
  %138 = vmatprep.subr.bf16.mxu0 0
  %139 = vmatpush2.bf16.msra.mxu0 0
  %140 = vmatprep.subr.bf16.mxu0 0
  %141 = vmatpush2.bf16.msra.mxu0 0
  %142 = vmatprep.subr.bf16.mxu0 0
  %143 = vmatpush2.bf16.msra.mxu0 0
  %144 = vmatprep.subr.bf16.mxu0 0
  %145 = vmatpush2.bf16.msra.mxu0 0
  %146 = vmatprep.subr.bf16.mxu0 0
  %147 = vmatpush2.bf16.msra.mxu0 0
  %148 = vmatprep.subr.bf16.mxu0 0
  %149 = vmatpush2.bf16.msra.mxu0 0
  %150 = vmatprep.mubr.bf16.mxu0 0
  %151 = vmatmul.mubr.bf16.gmra.mxu0 %v68
  %v152 = vpop.f32.mrf.mxu0
  %v153 = vadd.f32 0.0, %v152
  %v154 = vpop.f32.mrf.mxu0
  %v155 = vpop.f32.mrf.mxu0
  %v156 = vadd.f32 0.0, %v155
  %v157 = vpop.f32.mrf.mxu0
  %158 = vdwg.mxu0
  %v161 = vunpack.c.l.b16 %v25
  %v162 = vunpack.c.l.b16 %v26
  %v163 = vpack.c.b16 %v162, %v161
  %v181 = vunpack.c.l.b16 %v27
  %v182 = vunpack.c.l.b16 %v28
  %v183 = vunpack.c.l.b16 %v29
  %v184 = vunpack.c.l.b16 %v30
  %v185 = vunpack.c.l.b16 %v31
  %v186 = vunpack.c.l.b16 %v32
  %v187 = vunpack.c.l.b16 %v33
  %v188 = vunpack.c.l.b16 %v34
  %v189 = vunpack.c.l.b16 %v35
  %v190 = vunpack.c.l.b16 %v36
  %v191 = vunpack.c.l.b16 %v37
  %v192 = vunpack.c.l.b16 %v38
  %v193 = vunpack.c.l.b16 %v39
  %v194 = vunpack.c.l.b16 %v40
  %v195 = vunpack.c.l.b16 %v41
  %v196 = vunpack.c.l.b16 %v42
  %v197 = vpack.c.b16 %v182, %v181
  %v198 = vpack.c.b16 %v184, %v183
  %v199 = vpack.c.b16 %v186, %v185
  %v200 = vpack.c.b16 %v188, %v187
  %v201 = vpack.c.b16 %v190, %v189
  %v202 = vpack.c.b16 %v192, %v191
  %v203 = vpack.c.b16 %v194, %v193
  %v204 = vpack.c.b16 %v196, %v195
  %213 = vmatprep.subr.bf16.mxu0 0
  %214 = vmatpush1.bf16.msra.mxu0 %v204
  %215 = vmatprep.subr.bf16.mxu0 0
  %216 = vmatpush1.bf16.msra.mxu0 %v203
  %217 = vmatprep.subr.bf16.mxu0 0
  %218 = vmatpush1.bf16.msra.mxu0 %v202
  %219 = vmatprep.subr.bf16.mxu0 0
  %220 = vmatpush1.bf16.msra.mxu0 %v201
  %221 = vmatprep.subr.bf16.mxu0 0
  %222 = vmatpush1.bf16.msra.mxu0 %v200
  %223 = vmatprep.subr.bf16.mxu0 0
  %224 = vmatpush1.bf16.msra.mxu0 %v199
  %225 = vmatprep.subr.bf16.mxu0 0
  %226 = vmatpush1.bf16.msra.mxu0 %v198
  %227 = vmatprep.subr.bf16.mxu0 0
  %228 = vmatpush1.bf16.msra.mxu0 %v197
  %229 = vmatprep.subr.bf16.mxu0 0
  %230 = vmatpush2.bf16.msra.mxu0 0
  %231 = vmatprep.subr.bf16.mxu0 0
  %232 = vmatpush2.bf16.msra.mxu0 0
  %233 = vmatprep.subr.bf16.mxu0 0
  %234 = vmatpush2.bf16.msra.mxu0 0
  %235 = vmatprep.subr.bf16.mxu0 0
  %236 = vmatpush2.bf16.msra.mxu0 0
  %237 = vmatprep.subr.bf16.mxu0 0
  %238 = vmatpush2.bf16.msra.mxu0 0
  %239 = vmatprep.subr.bf16.mxu0 0
  %240 = vmatpush2.bf16.msra.mxu0 0
  %241 = vmatprep.subr.bf16.mxu0 0
  %242 = vmatpush2.bf16.msra.mxu0 0
  %243 = vmatprep.subr.bf16.mxu0 0
  %244 = vmatpush2.bf16.msra.mxu0 0
  %245 = vmatprep.mubr.bf16.mxu0 0
  %246 = vmatmul.mubr.bf16.gmra.mxu0 %v163
  %v247 = vpop.f32.mrf.mxu0
  %v248 = vadd.f32 %v153, %v247
  %v249 = vpop.f32.mrf.mxu0
  %v250 = vpop.f32.mrf.mxu0
  %v251 = vadd.f32 %v156, %v250
  %v252 = vpop.f32.mrf.mxu0
  %253 = vdwg.mxu0
  %v254 = vadd.f32 %v248, %v251
  %v255 = vrot.slane %v254, 4
  %v256 = vadd.f32 %v254, %v255
  %v257 = vrot.slane %v256, 2
  %v258 = vadd.f32 %v256, %v257
  %v259 = vrot.slane %v258, 1
  %v260 = vadd.f32 %v258, %v259
  %v261 = vmul.f32 %v248, %v248
  %v262 = vmul.f32 %v251, %v251
  %v263 = vadd.f32 %v261, %v262
  %v264 = vrot.slane %v263, 4
  %v265 = vadd.f32 %v263, %v264
  %v266 = vrot.slane %v265, 2
  %v267 = vadd.f32 %v265, %v266
  %v268 = vrot.slane %v267, 1
  %v269 = vadd.f32 %v267, %v268
  %vm270 = vcmask 1040384
  %v271 = vsel %vm270, %v260, %v269
  %272 = vst [vmem:[%s4] sm:$0x3] %v271
  %vm273 = vcmask 523264
  %274 = vst.msk [vmem:[%s2] sm:$0xff] %vm273, %v248
  %275 = vst.msk [vmem:[%s2 + $0x8] sm:$0xff] %vm273, %v251
  %278 = vrot.lane.b32.xlu0 %v248, 64
  %v279 = vpop.permute.xlu0 %278
  %280 = vrot.lane.b32.xlu0 %v251, 64
  %v281 = vpop.permute.xlu0 %280
  %284 = vst.msk [vmem:[%s3] sm:$0xff] %vm273, %v279
  %285 = vst.msk [vmem:[%s3 + $0x8] sm:$0xff] %vm273, %v281
  // Predicated region
  $region10: #{block_forward.3} parent=0 // pred_check
    _
  $region11: #{block_forward.3} parent=0 // pred_check_branch
    %287 = sbr.rel (0) target = $region13
  $region12: #{block_forward.3} parent=0 // pred_region
    _
  $region13: #{block_forward.3} parent=0 // pred_fallthru
    _
  // Predicated region
  $region14: #{block_forward.3} parent=0 // pred_check
    _
  $region15: #{block_forward.3} parent=0 // pred_check_branch
    %289 = sbr.rel (0) target = $region17
  $region16: #{block_forward.3} parent=0 // pred_region
    _
  $region17: #{block_forward.3} parent=0 // pred_fallthru
    _
  // Predicated region
  $region18: #{block_forward.3} parent=0 // pred_check
    _
  $region19: #{block_forward.3} parent=0 // pred_check_branch
    %291 = sbr.rel (0) target = $region21
  $region20: #{block_forward.3} parent=0 // pred_region
    _
  $region21: #{block_forward.3} parent=0 // pred_fallthru
    _
  // Predicated region
  $region22: #{block_forward.3} parent=0 // pred_check
    _
  $region23: #{block_forward.3} parent=0 // pred_check_branch
    %293 = sbr.rel (0) target = $region25
  $region24: #{block_forward.3} parent=0 // pred_region
    _
  $region25: #{block_forward.3} parent=0 // pred_fallthru
    _
  // Predicated region
  $region26: #{block_forward.3} parent=0 // pred_check
    _
  $region27: #{block_forward.3} parent=0 // pred_check_branch
    %295 = sbr.rel (0) target = $region29
  $region28: #{block_forward.3} parent=0 // pred_region
    _
  $region29: #{block_forward.3} parent=0 // pred_fallthru
    _
  // Predicated region
  $region30: #{block_forward.3} parent=0 // pred_check
    _
  $region31: #{block_forward.3} parent=0 // pred_check_branch
    %297 = sbr.rel (0) target = $region33
  $region32: #{block_forward.3} parent=0 // pred_region
    _
  $region33: #{block_forward.3} parent=0 // pred_fallthru
    _

// kernel: block_forward.4
$region0: #{block_forward.4}
  #allocation0 [shape = 'u32[]', space=smem, size = 0x4, offset = 0x4, fixed_abs, tag = 'smem constant byte address 0x4 - core index']
  #allocation1 [shape = 'u32[144,128]{1,0:T(1,128)}', space=vmem, size = 0x12000, scoped, tag = 'internal scratch']
  #allocation2 [shape = 'f32[2,10,64]{2,1,0:T(8,128)}', space=vmem, size = 0x4000, scoped, tag = 'scratch operand']
  %s0 = inlined_call_operand.vmem [shape: f32[2,8,64], index: 0, kind: input, shape index: {}]
  %s1 = inlined_call_operand.vmem [shape: f32[1,64], index: 1, kind: input, shape index: {}]
  %s2 = inlined_call_operand.vmem [shape: f32[1,64], index: 2, kind: input, shape index: {}]
  %s3 = inlined_call_operand.vmem [shape: bf16[3,64,64], index: 3, kind: input, shape index: {}]
  %s4 = inlined_call_operand.vmem [shape: f32[2,8,64], index: 4, kind: output, shape index: {0}]
  %s5 = inlined_call_operand.vmem [shape: f32[1,2,64], index: 5, kind: output, shape index: {1}]
  %6 = xla_tuple %s4, %s5
  %s7 = sld [smem:[#allocation0]]
  $region34: #{block_forward.4} parent=0
    _
  %s9 = ssub.s32 1, %s7
  %s10 = scalar_select 0, %s9, %s7
  // Predicated region
  $region2: #{block_forward.4} parent=0 // pred_check
    _
  $region3: #{block_forward.4} parent=0 // pred_check_branch
    %12 = sbr.rel (0) target = $region5
  $region4: #{block_forward.4} parent=0 // pred_region
    _
  $region5: #{block_forward.4} parent=0 // pred_fallthru
    _
  // Predicated region
  $region6: #{block_forward.4} parent=0 // pred_check
    _
  $region7: #{block_forward.4} parent=0 // pred_check_branch
    %14 = sbr.rel (0) target = $region9
  $region8: #{block_forward.4} parent=0 // pred_region
    _
  $region9: #{block_forward.4} parent=0 // pred_fallthru
    _
  // Predicated region
  $region10: #{block_forward.4} parent=0 // pred_check
    _
  $region11: #{block_forward.4} parent=0 // pred_check_branch
    %16 = sbr.rel (0) target = $region13
  $region12: #{block_forward.4} parent=0 // pred_region
    _
  $region13: #{block_forward.4} parent=0 // pred_fallthru
    _
  // Predicated region
  $region14: #{block_forward.4} parent=0 // pred_check
    _
  $region15: #{block_forward.4} parent=0 // pred_check_branch
    %18 = sbr.rel (0) target = $region17
  $region16: #{block_forward.4} parent=0 // pred_region
    _
  $region17: #{block_forward.4} parent=0 // pred_fallthru
    _
  %v20 = vld [vmem:[%s0] sm:$0xff]
  %v21 = vld [vmem:[%s0 + $0x8] sm:$0xff]
  %v22 = vld [vmem:[%s1] sm:$0x1]
  %v24 = vlaneseq
  %v25 = vshrl.u32 %v24, 7
  %v26 = vsub.s32 0, %v25
  %v27 = vrot.slane %v22, %v26
  %v29 = vmul.f32 %v20, %v27
  %v30 = vmul.f32 %v21, %v27
  %v31 = vld [vmem:[%s2] sm:$0x1]
  %v33 = vlaneseq
  %v34 = vshrl.u32 %v33, 7
  %v35 = vsub.s32 0, %v34
  %v36 = vrot.slane %v31, %v35
  %v38 = vadd.f32 %v29, %v36
  %v39 = vadd.f32 %v30, %v36
  %v40 = vmax.f32 %v38, 0.0
  %v41 = vmax.f32 %v39, 0.0
  %vm42 = vcmask 516096
  %43 = vst.msk [vmem:[#allocation2] sm:$0x1] %vm42, 0.0
  %44 = vst.msk [vmem:[#allocation2 + $0x10] sm:$0x1] %vm42, 0.0
  %45 = vst.msk [vmem:[#allocation2 + $0x9] sm:$0x1] %vm42, 0.0
  %46 = vst.msk [vmem:[#allocation2 + $0x19] sm:$0x1] %vm42, 0.0
  %vm47 = vcmask 523264
  %48 = vst.msk [vmem:[#allocation2 + $0x1] sm:$0xff] %vm47, %v40
  %49 = vst.msk [vmem:[#allocation2 + $0x11] sm:$0xff] %vm47, %v41
  %v50 = vld [vmem:[#allocation2] sm:$0xff]
  %v51 = vld [vmem:[#allocation2 + $0x10] sm:$0xff]
  %v52 = vpack.c.bf16 %v50, %v50
  %v53 = vpack.c.bf16 %v51, %v51
  %v54 = vld [vmem:[%s3] sm:$0xf]
  %v55 = vld [vmem:[%s3 + $0x4] sm:$0xf]
  %v56 = vld [vmem:[%s3 + $0x8] sm:$0xf]
  %v57 = vld [vmem:[%s3 + $0xc] sm:$0xf]
  %v58 = vld [vmem:[%s3 + $0x10] sm:$0xf]
  %v59 = vld [vmem:[%s3 + $0x14] sm:$0xf]
  %v60 = vld [vmem:[%s3 + $0x18] sm:$0xf]
  %v61 = vld [vmem:[%s3 + $0x1c] sm:$0xf]
  %v62 = vld [vmem:[#allocation2 + $0x1] sm:$0xff]
  %v63 = vld [vmem:[#allocation2 + $0x11] sm:$0xff]
  %v64 = vpack.c.bf16 %v62, %v62
  %v65 = vpack.c.bf16 %v63, %v63
  %s66 = scalar_lea.vmem %s3, 32
  %v67 = vld [vmem:[%s66] sm:$0xf]
  %v68 = vld [vmem:[%s66 + $0x4] sm:$0xf]
  %v69 = vld [vmem:[%s66 + $0x8] sm:$0xf]
  %v70 = vld [vmem:[%s66 + $0xc] sm:$0xf]
  %v71 = vld [vmem:[%s66 + $0x10] sm:$0xf]
  %v72 = vld [vmem:[%s66 + $0x14] sm:$0xf]
  %v73 = vld [vmem:[%s66 + $0x18] sm:$0xf]
  %v74 = vld [vmem:[%s66 + $0x1c] sm:$0xf]
  %v77 = vunpack.c.l.b16 %v64
  %v78 = vunpack.c.l.b16 %v65
  %v79 = vpack.c.b16 %v78, %v77
  %v88 = vunpack.c.l.b16 %v67
  %v89 = vunpack.c.l.b16 %v68
  %v90 = vunpack.c.l.b16 %v69
  %v91 = vunpack.c.l.b16 %v70
  %v92 = vunpack.c.l.b16 %v71
  %v93 = vunpack.c.l.b16 %v72
  %v94 = vunpack.c.l.b16 %v73
  %v95 = vunpack.c.l.b16 %v74
  %v96 = vpack.c.b16 %v89, %v88
  %v97 = vpack.c.b16 %v91, %v90
  %v98 = vpack.c.b16 %v93, %v92
  %v99 = vpack.c.b16 %v95, %v94
  %v105 = vsel %vm47, %v79, 0
  %107 = vmatprep.subr.bf16.mxu0 0
  %108 = vmatpush1.bf16.msra.mxu0 0
  %109 = vmatprep.subr.bf16.mxu0 0
  %110 = vmatpush1.bf16.msra.mxu0 0
  %111 = vmatprep.subr.bf16.mxu0 0
  %112 = vmatpush1.bf16.msra.mxu0 0
  %113 = vmatprep.subr.bf16.mxu0 0
  %114 = vmatpush1.bf16.msra.mxu0 0
  %115 = vmatprep.subr.bf16.mxu0 0
  %116 = vmatpush1.bf16.msra.mxu0 %v99
  %117 = vmatprep.subr.bf16.mxu0 0
  %118 = vmatpush1.bf16.msra.mxu0 %v98
  %119 = vmatprep.subr.bf16.mxu0 0
  %120 = vmatpush1.bf16.msra.mxu0 %v97
  %121 = vmatprep.subr.bf16.mxu0 0
  %122 = vmatpush1.bf16.msra.mxu0 %v96
  %123 = vmatprep.subr.bf16.mxu0 0
  %124 = vmatpush2.bf16.msra.mxu0 0
  %125 = vmatprep.subr.bf16.mxu0 0
  %126 = vmatpush2.bf16.msra.mxu0 0
  %127 = vmatprep.subr.bf16.mxu0 0
  %128 = vmatpush2.bf16.msra.mxu0 0
  %129 = vmatprep.subr.bf16.mxu0 0
  %130 = vmatpush2.bf16.msra.mxu0 0
  %131 = vmatprep.subr.bf16.mxu0 0
  %132 = vmatpush2.bf16.msra.mxu0 0
  %133 = vmatprep.subr.bf16.mxu0 0
  %134 = vmatpush2.bf16.msra.mxu0 0
  %135 = vmatprep.subr.bf16.mxu0 0
  %136 = vmatpush2.bf16.msra.mxu0 0
  %137 = vmatprep.subr.bf16.mxu0 0
  %138 = vmatpush2.bf16.msra.mxu0 0
  %139 = vmatprep.mubr.bf16.mxu0 0
  %140 = vmatmul.mubr.bf16.gmra.mxu0 %v105
  %v141 = vpop.f32.mrf.mxu0
  %v142 = vadd.f32 0.0, %v141
  %v143 = vpop.f32.mrf.mxu0
  %v144 = vpop.f32.mrf.mxu0
  %v145 = vadd.f32 0.0, %v144
  %v146 = vpop.f32.mrf.mxu0
  %147 = vdwg.mxu0
  %v150 = vunpack.c.l.b16 %v52
  %v151 = vunpack.c.l.b16 %v53
  %v152 = vpack.c.b16 %v151, %v150
  %v161 = vunpack.c.l.b16 %v54
  %v162 = vunpack.c.l.b16 %v55
  %v163 = vunpack.c.l.b16 %v56
  %v164 = vunpack.c.l.b16 %v57
  %v165 = vunpack.c.l.b16 %v58
  %v166 = vunpack.c.l.b16 %v59
  %v167 = vunpack.c.l.b16 %v60
  %v168 = vunpack.c.l.b16 %v61
  %v169 = vpack.c.b16 %v162, %v161
  %v170 = vpack.c.b16 %v164, %v163
  %v171 = vpack.c.b16 %v166, %v165
  %v172 = vpack.c.b16 %v168, %v167
  %v178 = vsel %vm47, %v152, 0
  %180 = vmatprep.subr.bf16.mxu0 0
  %181 = vmatpush1.bf16.msra.mxu0 0
  %182 = vmatprep.subr.bf16.mxu0 0
  %183 = vmatpush1.bf16.msra.mxu0 0
  %184 = vmatprep.subr.bf16.mxu0 0
  %185 = vmatpush1.bf16.msra.mxu0 0
  %186 = vmatprep.subr.bf16.mxu0 0
  %187 = vmatpush1.bf16.msra.mxu0 0
  %188 = vmatprep.subr.bf16.mxu0 0
  %189 = vmatpush1.bf16.msra.mxu0 %v172
  %190 = vmatprep.subr.bf16.mxu0 0
  %191 = vmatpush1.bf16.msra.mxu0 %v171
  %192 = vmatprep.subr.bf16.mxu0 0
  %193 = vmatpush1.bf16.msra.mxu0 %v170
  %194 = vmatprep.subr.bf16.mxu0 0
  %195 = vmatpush1.bf16.msra.mxu0 %v169
  %196 = vmatprep.subr.bf16.mxu0 0
  %197 = vmatpush2.bf16.msra.mxu0 0
  %198 = vmatprep.subr.bf16.mxu0 0
  %199 = vmatpush2.bf16.msra.mxu0 0
  %200 = vmatprep.subr.bf16.mxu0 0
  %201 = vmatpush2.bf16.msra.mxu0 0
  %202 = vmatprep.subr.bf16.mxu0 0
  %203 = vmatpush2.bf16.msra.mxu0 0
  %204 = vmatprep.subr.bf16.mxu0 0
  %205 = vmatpush2.bf16.msra.mxu0 0
  %206 = vmatprep.subr.bf16.mxu0 0
  %207 = vmatpush2.bf16.msra.mxu0 0
  %208 = vmatprep.subr.bf16.mxu0 0
  %209 = vmatpush2.bf16.msra.mxu0 0
  %210 = vmatprep.subr.bf16.mxu0 0
  %211 = vmatpush2.bf16.msra.mxu0 0
  %212 = vmatprep.mubr.bf16.mxu0 0
  %213 = vmatmul.mubr.bf16.gmra.mxu0 %v178
  %v214 = vpop.f32.mrf.mxu0
  %v215 = vadd.f32 %v142, %v214
  %v216 = vpop.f32.mrf.mxu0
  %v217 = vpop.f32.mrf.mxu0
  %v218 = vadd.f32 %v145, %v217
  %v219 = vpop.f32.mrf.mxu0
  %220 = vdwg.mxu0
  %v221 = vld [vmem:[#allocation2 + $0x2] sm:$0xff]
  %v222 = vld [vmem:[#allocation2 + $0x12] sm:$0xff]
  %v223 = vpack.c.bf16 %v221, %v221
  %v224 = vpack.c.bf16 %v222, %v222
  %s225 = scalar_lea.vmem %s3, 64
  %v226 = vld [vmem:[%s225] sm:$0xf]
  %v227 = vld [vmem:[%s225 + $0x4] sm:$0xf]
  %v228 = vld [vmem:[%s225 + $0x8] sm:$0xf]
  %v229 = vld [vmem:[%s225 + $0xc] sm:$0xf]
  %v230 = vld [vmem:[%s225 + $0x10] sm:$0xf]
  %v231 = vld [vmem:[%s225 + $0x14] sm:$0xf]
  %v232 = vld [vmem:[%s225 + $0x18] sm:$0xf]
  %v233 = vld [vmem:[%s225 + $0x1c] sm:$0xf]
  %v236 = vunpack.c.l.b16 %v223
  %v237 = vunpack.c.l.b16 %v224
  %v238 = vpack.c.b16 %v237, %v236
  %v247 = vunpack.c.l.b16 %v226
  %v248 = vunpack.c.l.b16 %v227
  %v249 = vunpack.c.l.b16 %v228
  %v250 = vunpack.c.l.b16 %v229
  %v251 = vunpack.c.l.b16 %v230
  %v252 = vunpack.c.l.b16 %v231
  %v253 = vunpack.c.l.b16 %v232
  %v254 = vunpack.c.l.b16 %v233
  %v255 = vpack.c.b16 %v248, %v247
  %v256 = vpack.c.b16 %v250, %v249
  %v257 = vpack.c.b16 %v252, %v251
  %v258 = vpack.c.b16 %v254, %v253
  %v264 = vsel %vm47, %v238, 0
  %266 = vmatprep.subr.bf16.mxu0 0
  %267 = vmatpush1.bf16.msra.mxu0 0
  %268 = vmatprep.subr.bf16.mxu0 0
  %269 = vmatpush1.bf16.msra.mxu0 0
  %270 = vmatprep.subr.bf16.mxu0 0
  %271 = vmatpush1.bf16.msra.mxu0 0
  %272 = vmatprep.subr.bf16.mxu0 0
  %273 = vmatpush1.bf16.msra.mxu0 0
  %274 = vmatprep.subr.bf16.mxu0 0
  %275 = vmatpush1.bf16.msra.mxu0 %v258
  %276 = vmatprep.subr.bf16.mxu0 0
  %277 = vmatpush1.bf16.msra.mxu0 %v257
  %278 = vmatprep.subr.bf16.mxu0 0
  %279 = vmatpush1.bf16.msra.mxu0 %v256
  %280 = vmatprep.subr.bf16.mxu0 0
  %281 = vmatpush1.bf16.msra.mxu0 %v255
  %282 = vmatprep.subr.bf16.mxu0 0
  %283 = vmatpush2.bf16.msra.mxu0 0
  %284 = vmatprep.subr.bf16.mxu0 0
  %285 = vmatpush2.bf16.msra.mxu0 0
  %286 = vmatprep.subr.bf16.mxu0 0
  %287 = vmatpush2.bf16.msra.mxu0 0
  %288 = vmatprep.subr.bf16.mxu0 0
  %289 = vmatpush2.bf16.msra.mxu0 0
  %290 = vmatprep.subr.bf16.mxu0 0
  %291 = vmatpush2.bf16.msra.mxu0 0
  %292 = vmatprep.subr.bf16.mxu0 0
  %293 = vmatpush2.bf16.msra.mxu0 0
  %294 = vmatprep.subr.bf16.mxu0 0
  %295 = vmatpush2.bf16.msra.mxu0 0
  %296 = vmatprep.subr.bf16.mxu0 0
  %297 = vmatpush2.bf16.msra.mxu0 0
  %298 = vmatprep.mubr.bf16.mxu0 0
  %299 = vmatmul.mubr.bf16.gmra.mxu0 %v264
  %v300 = vpop.f32.mrf.mxu0
  %v301 = vadd.f32 0.0, %v300
  %v302 = vpop.f32.mrf.mxu0
  %v303 = vpop.f32.mrf.mxu0
  %v304 = vadd.f32 0.0, %v303
  %v305 = vpop.f32.mrf.mxu0
  %306 = vdwg.mxu0
  %v307 = vadd.f32 %v215, %v301
  %v308 = vadd.f32 %v218, %v304
  %v309 = vsel %vm47, %v307, 0.0
  %v310 = vsel %vm47, %v308, 0.0
  %v311 = vadd.f32 %v309, %v310
  %v312 = vrot.slane %v311, 4
  %v313 = vadd.f32 %v311, %v312
  %v314 = vrot.slane %v313, 2
  %v315 = vadd.f32 %v313, %v314
  %v316 = vrot.slane %v315, 1
  %v317 = vadd.f32 %v315, %v316
  %v318 = vmul.f32 %v307, %v307
  %v319 = vmul.f32 %v308, %v308
  %v320 = vsel %vm47, %v318, 0.0
  %v321 = vsel %vm47, %v319, 0.0
  %v322 = vadd.f32 %v320, %v321
  %v323 = vrot.slane %v322, 4
  %v324 = vadd.f32 %v322, %v323
  %v325 = vrot.slane %v324, 2
  %v326 = vadd.f32 %v324, %v325
  %v327 = vrot.slane %v326, 1
  %v328 = vadd.f32 %v326, %v327
  %vm329 = vcmask 1040384
  %v330 = vsel %vm329, %v317, %v328
  %vm331 = vcmask 517120
  %332 = vst.msk [vmem:[%s5] sm:$0x3] %vm331, %v330
  %333 = vst.msk [vmem:[%s4] sm:$0xff] %vm47, %v307
  %334 = vst.msk [vmem:[%s4 + $0x8] sm:$0xff] %vm47, %v308
  // Predicated region
  $region18: #{block_forward.4} parent=0 // pred_check
    _
  $region19: #{block_forward.4} parent=0 // pred_check_branch
    %336 = sbr.rel (0) target = $region21
  $region20: #{block_forward.4} parent=0 // pred_region
    _
  $region21: #{block_forward.4} parent=0 // pred_fallthru
    _
  // Predicated region
  $region22: #{block_forward.4} parent=0 // pred_check
    _
  $region23: #{block_forward.4} parent=0 // pred_check_branch
    %338 = sbr.rel (0) target = $region25
  $region24: #{block_forward.4} parent=0 // pred_region
    _
  $region25: #{block_forward.4} parent=0 // pred_fallthru
    _
  // Predicated region
  $region26: #{block_forward.4} parent=0 // pred_check
    _
  $region27: #{block_forward.4} parent=0 // pred_check_branch
    %340 = sbr.rel (0) target = $region29
  $region28: #{block_forward.4} parent=0 // pred_region
    _
  $region29: #{block_forward.4} parent=0 // pred_fallthru
    _
  // Predicated region
  $region30: #{block_forward.4} parent=0 // pred_check
    _
  $region31: #{block_forward.4} parent=0 // pred_check_branch
    %342 = sbr.rel (0) target = $region33
  $region32: #{block_forward.4} parent=0 // pred_region
    _
  $region33: #{block_forward.4} parent=0 // pred_fallthru
    _

</llo_original>
